<compile_context>
chip_gen: v7x
topology: tpu7x:2x2x1
jax: 0.10.0
libtpu: 0.0.40
codegen_flags: <defaults>
</compile_context>

<pallas_src>
import functools

import jax
import jax.numpy as jnp
from jax.experimental import pallas as pl
from jax.experimental.pallas import tpu as pltpu


def _se_bottleneck_kernel(H, W,
                          x_ref, w1_ref, b1_ref,
                          w2_ref, b2_ref,
                          w3_ref, b3_ref,
                          wse1_ref, wse2_ref,
                          o_ref, pad_ref):
    """One batch-block (nb images, nb*H*W matmul rows) per grid step."""
    nb = x_ref.shape[0]
    HW = x_ref.shape[1]
    Cin = x_ref.shape[2]
    P = w1_ref.shape[1]            # planes
    C4 = w3_ref.shape[1]           # planes * expansion
    rows = nb * HW

    x3 = x_ref[...].astype(jnp.float32)                  # (nb, H*W, Cin)
    x = x3.reshape(rows, Cin)                            # free regroup

    # --- conv1 (1x1, bn1 scale pre-folded) + shift + relu --------------------
    t1 = jnp.dot(x, w1_ref[...], preferred_element_type=jnp.float32)
    t1 = jnp.maximum(t1 + b1_ref[...], 0.0)                      # (rows, P)

    # --- conv2 (3x3, stride=1, pad=1, bn2 scale pre-folded) + shift + relu ---
    # Zero-framed halo scratch, then a single im2col matmul with K = 9*P.
    # (Full zero-fill each step is a few KiB of vreg stores and is megacore-
    #  safe, unlike a program_id==0 gate on a "parallel" grid axis.)
    pad_ref[...] = jnp.zeros_like(pad_ref)
    pad_ref[:, 1:H + 1, 1:W + 1, :] = t1.reshape(nb, H, W, P)
    pieces = [
        pad_ref[:, dh:dh + H, dw:dw + W, :].reshape(rows, P)
        for dh in range(3) for dw in range(3)
    ]
    im2col = jnp.concatenate(pieces, axis=1)             # (rows, 9*P)
    t2 = jnp.dot(im2col, w2_ref[...], preferred_element_type=jnp.float32)
    t2 = jnp.maximum(t2 + b2_ref[...], 0.0)                      # (rows, P)

    # --- conv3 (1x1, bn3 scale pre-folded) + shift ----------------------------
    t3 = jnp.dot(t2, w3_ref[...], preferred_element_type=jnp.float32)
    t3 = t3 + b3_ref[...]                                        # (rows, C4)

    # --- Squeeze-and-Excitation (once per block) -----------------------------
    t3b = t3.reshape(nb, HW, C4)
    y = jnp.mean(t3b, axis=1)                                    # (nb, C4)
    hid = jnp.maximum(jnp.dot(y, wse1_ref[...],
                              preferred_element_type=jnp.float32), 0.0)
    gate = jax.nn.sigmoid(jnp.dot(hid, wse2_ref[...],
                                  preferred_element_type=jnp.float32))  # (nb, C4)
    out = t3b * gate[:, None, :]

    # --- identity residual (downsample=None => Cin == C4) + relu -------------
    out = jnp.maximum(out + x3, 0.0)
    o_ref[...] = out.astype(o_ref.dtype)


def se_bottleneck(x_nchw, params, *, images_per_block=None):
    """params = (w1, s1, b1, w2, s2, b2, w3, s3, b3, wse1, wse2).

    w1: (Cin, P), w2: (3, 3, P, P) HWIO, w3: (P, 4P), wse1: (4P, Cr),
    wse2: (Cr, 4P); s*/b* are 1-D folded FrozenBatchNorm scale/shift.
    """
    (w1, s1, b1, w2, s2, b2, w3, s3, b3, wse1, wse2) = params
    N, Cin, H, W = x_nchw.shape
    HW = H * W
    P = w1.shape[1]
    C4 = w3.shape[1]
    Cr = wse1.shape[1]
    assert Cin == C4, "downsample=None requires inplanes == planes * expansion"

    if images_per_block is None:
        # Fold enough images into one grid step to fill the MXU row dim
        # (>= 128 rows); must divide N. Large batches still leave several
        # parallel grid steps for the dual TensorCores on v7x.
        images_per_block = max(1, min(N, pl.cdiv(128, HW)))
        while N % images_per_block:
            images_per_block -= 1
    nb = images_per_block
    nblocks = N // nb

    # Wrapper-side layout plumbing (free XLA reshapes / tiny constant folds),
    # so the kernel sees matmul-friendly slabs and needs no in-kernel relayout:
    #  - NCHW -> (N, H*W, C)
    #  - conv weights as matmul matrices with the per-output-channel frozen-BN
    #    scale folded in (scale commutes with the convolution).
    x_flat = jnp.transpose(x_nchw, (0, 2, 3, 1)).reshape(N, HW, Cin)
    w1s = w1 * s1[None, :]                                     # (Cin, P)
    w2s = (w2 * s2[None, None, None, :]).reshape(9 * P, P)     # (dh,dw,cin)-major
    w3s = w3 * s3[None, :]                                     # (P, C4)
    b1r = b1.reshape(1, P)
    b2r = b2.reshape(1, P)
    b3r = b3.reshape(1, C4)

    kernel = functools.partial(_se_bottleneck_kernel, H, W)

    out_flat = pl.pallas_call(
        kernel,
        out_shape=jax.ShapeDtypeStruct((N, HW, C4), x_flat.dtype),
        grid_spec=pltpu.PrefetchScalarGridSpec(
            num_scalar_prefetch=0,
            grid=(nblocks,),
            in_specs=[
                pl.BlockSpec((nb, HW, Cin), lambda b: (b, 0, 0)),
                pl.BlockSpec((Cin, P), lambda b: (0, 0)),
                pl.BlockSpec((1, P), lambda b: (0, 0)),
                pl.BlockSpec((9 * P, P), lambda b: (0, 0)),
                pl.BlockSpec((1, P), lambda b: (0, 0)),
                pl.BlockSpec((P, C4), lambda b: (0, 0)),
                pl.BlockSpec((1, C4), lambda b: (0, 0)),
                pl.BlockSpec((C4, Cr), lambda b: (0, 0)),
                pl.BlockSpec((Cr, C4), lambda b: (0, 0)),
            ],
            out_specs=pl.BlockSpec((nb, HW, C4), lambda b: (b, 0, 0)),
            scratch_shapes=[
                pltpu.VMEM((nb, H + 2, W + 2, P), jnp.float32),  # conv2 halo
            ],
        ),
        compiler_params=pltpu.CompilerParams(
            dimension_semantics=("parallel",)),
    )(x_flat, w1s, b1r, w2s, b2r, w3s, b3r, wse1, wse2)

    return jnp.transpose(out_flat.reshape(N, H, W, C4), (0, 3, 1, 2))


def reference_nchw(x_nchw, params):
    """Pure-JAX reference matching the PyTorch module semantics."""
    (w1, s1, b1, w2, s2, b2, w3, s3, b3, wse1, wse2) = params
    x = jnp.transpose(x_nchw, (0, 2, 3, 1))          # NHWC
    Cin = x.shape[-1]
    P = w1.shape[1]
    C4 = w3.shape[1]
    dn = ('NHWC', 'HWIO', 'NHWC')
    hp = jax.lax.Precision.HIGHEST

    def bnorm(t, s, b):
        return t * s.reshape(1, 1, 1, -1) + b.reshape(1, 1, 1, -1)

    t1 = jax.lax.conv_general_dilated(x, w1.reshape(1, 1, Cin, P), (1, 1),
                                      'VALID', dimension_numbers=dn, precision=hp)
    t1 = jnp.maximum(bnorm(t1, s1, b1), 0.0)
    t2 = jax.lax.conv_general_dilated(t1, w2, (1, 1), 'SAME',
                                      dimension_numbers=dn, precision=hp)
    t2 = jnp.maximum(bnorm(t2, s2, b2), 0.0)
    t3 = jax.lax.conv_general_dilated(t2, w3.reshape(1, 1, P, C4), (1, 1),
                                      'VALID', dimension_numbers=dn, precision=hp)
    t3 = bnorm(t3, s3, b3)
    y = jnp.mean(t3, axis=(1, 2))                    # (N, C4)
    h = jnp.maximum(jnp.dot(y, wse1, precision=hp), 0.0)
    gate = jax.nn.sigmoid(jnp.dot(h, wse2, precision=hp))
    out = t3 * gate[:, None, None, :]
    out = jnp.maximum(out + x, 0.0)
    return jnp.transpose(out, (0, 3, 1, 2))


def make_params(key, inplanes, planes, reduction=16):
    """Deterministic synthetic parameters (FrozenBatchNorm folded, eps=0)."""
    C4 = planes * 4
    Cr = C4 // reduction
    ks = jax.random.split(key, 8)

    def frozen_bn(k, c):
        k1, k2, k3, k4 = jax.random.split(k, 4)
        weight = 1.0 + 0.1 * jax.random.normal(k1, (c,), jnp.float32)
        bias = 0.1 * jax.random.normal(k2, (c,), jnp.float32)
        mean = 0.1 * jax.random.normal(k3, (c,), jnp.float32)
        var = jax.random.uniform(k4, (c,), jnp.float32, 0.5, 1.5)
        scale = weight / jnp.sqrt(var)            # eps = 0.0 in the module
        shift = bias - mean * scale
        return scale, shift

    w1 = 0.1 * jax.random.normal(ks[0], (inplanes, planes), jnp.float32)
    w2 = 0.1 * jax.random.normal(ks[1], (3, 3, planes, planes), jnp.float32)  # HWIO
    w3 = 0.1 * jax.random.normal(ks[2], (planes, C4), jnp.float32)
    wse1 = 0.1 * jax.random.normal(ks[3], (C4, Cr), jnp.float32)
    wse2 = 0.1 * jax.random.normal(ks[4], (Cr, C4), jnp.float32)
    s1, b1 = frozen_bn(ks[5], planes)
    s2, b2 = frozen_bn(ks[6], planes)
    s3, b3 = frozen_bn(ks[7], C4)
    return (w1, s1, b1, w2, s2, b2, w3, s3, b3, wse1, wse2)


if __name__ == "__main__":
    # SEBottleneck(inplanes=64, planes=16, reduction=16), stride=1,
    # downsample=None  =>  identity residual (inplanes == planes * 4).
    N, INPLANES, PLANES, H, W = 2, 64, 16, 8, 8

    key = jax.random.PRNGKey(0)
    kx, kp = jax.random.split(key)
    x = jax.random.normal(kx, (N, INPLANES, H, W), jnp.float32)   # NCHW
    params = make_params(kp, INPLANES, PLANES, reduction=16)

    out = jax.block_until_ready(se_bottleneck(x, params))
    ref = jax.block_until_ready(reference_nchw(x, params))

    assert out.shape == (N, PLANES * 4, H, W)
    err = float(jnp.max(jnp.abs(out - ref)))
    assert err < 1e-2, f"mismatch vs reference, max abs err = {err}"

    print("KERNEL_OK")
</pallas_src>

<mosaic_0001>
module attributes {stable_mosaic.version = 11 : i64} {
  func.func @_se_bottleneck_kernel(%arg0: i32, %arg1: memref<2x64x64xf32, #tpu.memory_space<vmem>>, %arg2: memref<64x16xf32, #tpu.memory_space<vmem>>, %arg3: memref<1x16xf32, #tpu.memory_space<vmem>>, %arg4: memref<144x16xf32, #tpu.memory_space<vmem>>, %arg5: memref<1x16xf32, #tpu.memory_space<vmem>>, %arg6: memref<16x64xf32, #tpu.memory_space<vmem>>, %arg7: memref<1x64xf32, #tpu.memory_space<vmem>>, %arg8: memref<64x4xf32, #tpu.memory_space<vmem>>, %arg9: memref<4x64xf32, #tpu.memory_space<vmem>>, %arg10: memref<2x64x64xf32, #tpu.memory_space<vmem>>, %arg11: memref<2x10x10x16xf32, #tpu.memory_space<vmem>>) attributes {dimension_semantics = [#tpu.dimension_semantics<parallel>], iteration_bounds = array<i64: 1>, scalar_prefetch = 0 : i64, scratch_operands = 1 : i64, tpu.core_type = #tpu.core_type<tc>, window_params = [{transform_indices = @transform_0, window_bounds = array<i64: 2, 64, 64>}, {pipeline_mode = #tpu.pipeline_mode<synchronous>, transform_indices = @transform_1, window_bounds = array<i64: 64, 16>}, {pipeline_mode = #tpu.pipeline_mode<synchronous>, transform_indices = @transform_2, window_bounds = array<i64: 1, 16>}, {pipeline_mode = #tpu.pipeline_mode<synchronous>, transform_indices = @transform_3, window_bounds = array<i64: 144, 16>}, {pipeline_mode = #tpu.pipeline_mode<synchronous>, transform_indices = @transform_4, window_bounds = array<i64: 1, 16>}, {pipeline_mode = #tpu.pipeline_mode<synchronous>, transform_indices = @transform_5, window_bounds = array<i64: 16, 64>}, {pipeline_mode = #tpu.pipeline_mode<synchronous>, transform_indices = @transform_6, window_bounds = array<i64: 1, 64>}, {pipeline_mode = #tpu.pipeline_mode<synchronous>, transform_indices = @transform_7, window_bounds = array<i64: 64, 4>}, {pipeline_mode = #tpu.pipeline_mode<synchronous>, transform_indices = @transform_8, window_bounds = array<i64: 4, 64>}, {transform_indices = @transform_9, window_bounds = array<i64: 2, 64, 64>}]} {
    %c0 = arith.constant 0 : index
    %c0_0 = arith.constant 0 : index
    %c0_1 = arith.constant 0 : index
    %0 = vector.load %arg1[%c0, %c0_0, %c0_1] : memref<2x64x64xf32, #tpu.memory_space<vmem>>, vector<2x64x64xf32>
    %1 = vector.shape_cast %0 : vector<2x64x64xf32> to vector<128x64xf32>
    %c0_2 = arith.constant 0 : index
    %c0_3 = arith.constant 0 : index
    %2 = vector.load %arg2[%c0_2, %c0_3] : memref<64x16xf32, #tpu.memory_space<vmem>>, vector<64x16xf32>
    %cst = arith.constant dense<0.000000e+00> : vector<128x16xf32>
    %3 = tpu.matmul %1, %2, %cst {dimension_numbers = #tpu.dot_dimension_numbers<[1], [0], [0], [1], [0, 0, 1, 1], [], []>} : vector<128x64xf32>, vector<64x16xf32>, vector<128x16xf32> -> vector<128x16xf32>
    %c0_4 = arith.constant 0 : index
    %c0_5 = arith.constant 0 : index
    %4 = vector.load %arg3[%c0_4, %c0_5] : memref<1x16xf32, #tpu.memory_space<vmem>>, vector<1x16xf32>
    %5 = vector.broadcast %4 : vector<1x16xf32> to vector<128x16xf32>
    %6 = arith.addf %3, %5 : vector<128x16xf32>
    %cst_6 = arith.constant 0.000000e+00 : f32
    %7 = vector.broadcast %cst_6 : f32 to vector<128x16xf32>
    %8 = arith.maximumf %6, %7 : vector<128x16xf32>
    %cst_7 = arith.constant 0.000000e+00 : f32
    %9 = vector.broadcast %cst_7 : f32 to vector<2x10x10x16xf32>
    %c0_8 = arith.constant 0 : index
    %c0_9 = arith.constant 0 : index
    %c0_10 = arith.constant 0 : index
    %c0_11 = arith.constant 0 : index
    %10 = vector.load %arg11[%c0_8, %c0_9, %c0_10, %c0_11] : memref<2x10x10x16xf32, #tpu.memory_space<vmem>>, vector<2x10x10x16xf32>
    tpu.vector_store %arg11[%c0_8, %c0_9, %c0_10, %c0_11], %9 {strides = array<i32>} : memref<2x10x10x16xf32, #tpu.memory_space<vmem>>, vector<2x10x10x16xf32>,
    %11 = vector.shape_cast %8 : vector<128x16xf32> to vector<2x8x8x16xf32>
    %c0_12 = arith.constant 0 : index
    %c1 = arith.constant 1 : index
    %c1_13 = arith.constant 1 : index
    %c0_14 = arith.constant 0 : index
    %12 = vector.load %arg11[%c0_12, %c1, %c1_13, %c0_14] : memref<2x10x10x16xf32, #tpu.memory_space<vmem>>, vector<2x8x8x16xf32>
    tpu.vector_store %arg11[%c0_12, %c1, %c1_13, %c0_14], %11 {strides = array<i32>} : memref<2x10x10x16xf32, #tpu.memory_space<vmem>>, vector<2x8x8x16xf32>,
    %c0_15 = arith.constant 0 : index
    %c0_16 = arith.constant 0 : index
    %c0_17 = arith.constant 0 : index
    %c0_18 = arith.constant 0 : index
    %13 = vector.load %arg11[%c0_15, %c0_16, %c0_17, %c0_18] : memref<2x10x10x16xf32, #tpu.memory_space<vmem>>, vector<2x8x8x16xf32>
    %14 = vector.shape_cast %13 : vector<2x8x8x16xf32> to vector<128x16xf32>
    %c0_19 = arith.constant 0 : index
    %c0_20 = arith.constant 0 : index
    %c1_21 = arith.constant 1 : index
    %c0_22 = arith.constant 0 : index
    %15 = vector.load %arg11[%c0_19, %c0_20, %c1_21, %c0_22] : memref<2x10x10x16xf32, #tpu.memory_space<vmem>>, vector<2x8x8x16xf32>
    %16 = vector.shape_cast %15 : vector<2x8x8x16xf32> to vector<128x16xf32>
    %c0_23 = arith.constant 0 : index
    %c0_24 = arith.constant 0 : index
    %c2 = arith.constant 2 : index
    %c0_25 = arith.constant 0 : index
    %17 = vector.load %arg11[%c0_23, %c0_24, %c2, %c0_25] : memref<2x10x10x16xf32, #tpu.memory_space<vmem>>, vector<2x8x8x16xf32>
    %18 = vector.shape_cast %17 : vector<2x8x8x16xf32> to vector<128x16xf32>
    %c0_26 = arith.constant 0 : index
    %c1_27 = arith.constant 1 : index
    %c0_28 = arith.constant 0 : index
    %c0_29 = arith.constant 0 : index
    %19 = vector.load %arg11[%c0_26, %c1_27, %c0_28, %c0_29] : memref<2x10x10x16xf32, #tpu.memory_space<vmem>>, vector<2x8x8x16xf32>
    %20 = vector.shape_cast %19 : vector<2x8x8x16xf32> to vector<128x16xf32>
    %c0_30 = arith.constant 0 : index
    %c1_31 = arith.constant 1 : index
    %c1_32 = arith.constant 1 : index
    %c0_33 = arith.constant 0 : index
    %21 = vector.load %arg11[%c0_30, %c1_31, %c1_32, %c0_33] : memref<2x10x10x16xf32, #tpu.memory_space<vmem>>, vector<2x8x8x16xf32>
    %22 = vector.shape_cast %21 : vector<2x8x8x16xf32> to vector<128x16xf32>
    %c0_34 = arith.constant 0 : index
    %c1_35 = arith.constant 1 : index
    %c2_36 = arith.constant 2 : index
    %c0_37 = arith.constant 0 : index
    %23 = vector.load %arg11[%c0_34, %c1_35, %c2_36, %c0_37] : memref<2x10x10x16xf32, #tpu.memory_space<vmem>>, vector<2x8x8x16xf32>
    %24 = vector.shape_cast %23 : vector<2x8x8x16xf32> to vector<128x16xf32>
    %c0_38 = arith.constant 0 : index
    %c2_39 = arith.constant 2 : index
    %c0_40 = arith.constant 0 : index
    %c0_41 = arith.constant 0 : index
    %25 = vector.load %arg11[%c0_38, %c2_39, %c0_40, %c0_41] : memref<2x10x10x16xf32, #tpu.memory_space<vmem>>, vector<2x8x8x16xf32>
    %26 = vector.shape_cast %25 : vector<2x8x8x16xf32> to vector<128x16xf32>
    %c0_42 = arith.constant 0 : index
    %c2_43 = arith.constant 2 : index
    %c1_44 = arith.constant 1 : index
    %c0_45 = arith.constant 0 : index
    %27 = vector.load %arg11[%c0_42, %c2_43, %c1_44, %c0_45] : memref<2x10x10x16xf32, #tpu.memory_space<vmem>>, vector<2x8x8x16xf32>
    %28 = vector.shape_cast %27 : vector<2x8x8x16xf32> to vector<128x16xf32>
    %c0_46 = arith.constant 0 : index
    %c2_47 = arith.constant 2 : index
    %c2_48 = arith.constant 2 : index
    %c0_49 = arith.constant 0 : index
    %29 = vector.load %arg11[%c0_46, %c2_47, %c2_48, %c0_49] : memref<2x10x10x16xf32, #tpu.memory_space<vmem>>, vector<2x8x8x16xf32>
    %30 = vector.shape_cast %29 : vector<2x8x8x16xf32> to vector<128x16xf32>
    %31 = tpu.concatenate %14, %16, %18, %20, %22, %24, %26, %28, %30 in 1 : vector<128x16xf32>, vector<128x16xf32>, vector<128x16xf32>, vector<128x16xf32>, vector<128x16xf32>, vector<128x16xf32>, vector<128x16xf32>, vector<128x16xf32>, vector<128x16xf32> -> vector<128x144xf32>
    %c0_50 = arith.constant 0 : index
    %c0_51 = arith.constant 0 : index
    %32 = vector.load %arg4[%c0_50, %c0_51] : memref<144x16xf32, #tpu.memory_space<vmem>>, vector<144x16xf32>
    %cst_52 = arith.constant dense<0.000000e+00> : vector<128x16xf32>
    %33 = tpu.matmul %31, %32, %cst_52 {dimension_numbers = #tpu.dot_dimension_numbers<[1], [0], [0], [1], [0, 0, 1, 1], [], []>} : vector<128x144xf32>, vector<144x16xf32>, vector<128x16xf32> -> vector<128x16xf32>
    %c0_53 = arith.constant 0 : index
    %c0_54 = arith.constant 0 : index
    %34 = vector.load %arg5[%c0_53, %c0_54] : memref<1x16xf32, #tpu.memory_space<vmem>>, vector<1x16xf32>
    %35 = vector.broadcast %34 : vector<1x16xf32> to vector<128x16xf32>
    %36 = arith.addf %33, %35 : vector<128x16xf32>
    %cst_55 = arith.constant 0.000000e+00 : f32
    %37 = vector.broadcast %cst_55 : f32 to vector<128x16xf32>
    %38 = arith.maximumf %36, %37 : vector<128x16xf32>
    %c0_56 = arith.constant 0 : index
    %c0_57 = arith.constant 0 : index
    %39 = vector.load %arg6[%c0_56, %c0_57] : memref<16x64xf32, #tpu.memory_space<vmem>>, vector<16x64xf32>
    %cst_58 = arith.constant dense<0.000000e+00> : vector<128x64xf32>
    %40 = tpu.matmul %38, %39, %cst_58 {dimension_numbers = #tpu.dot_dimension_numbers<[1], [0], [0], [1], [0, 0, 1, 1], [], []>} : vector<128x16xf32>, vector<16x64xf32>, vector<128x64xf32> -> vector<128x64xf32>
    %c0_59 = arith.constant 0 : index
    %c0_60 = arith.constant 0 : index
    %41 = vector.load %arg7[%c0_59, %c0_60] : memref<1x64xf32, #tpu.memory_space<vmem>>, vector<1x64xf32>
    %42 = vector.broadcast %41 : vector<1x64xf32> to vector<128x64xf32>
    %43 = arith.addf %40, %42 : vector<128x64xf32>
    %44 = vector.shape_cast %43 : vector<128x64xf32> to vector<2x64x64xf32>
    %cst_61 = arith.constant dense<0.000000e+00> : vector<2x64xf32>
    %45 = vector.multi_reduction <add>, %44, %cst_61 [1] : vector<2x64x64xf32> to vector<2x64xf32>
    %cst_62 = arith.constant 6.400000e+01 : f32
    %46 = vector.broadcast %cst_62 : f32 to vector<2x64xf32>
    %47 = arith.divf %45, %46 : vector<2x64xf32>
    %c0_63 = arith.constant 0 : index
    %c0_64 = arith.constant 0 : index
    %48 = vector.load %arg8[%c0_63, %c0_64] : memref<64x4xf32, #tpu.memory_space<vmem>>, vector<64x4xf32>
    %cst_65 = arith.constant dense<0.000000e+00> : vector<2x4xf32>
    %49 = tpu.matmul %47, %48, %cst_65 {dimension_numbers = #tpu.dot_dimension_numbers<[1], [0], [0], [1], [0, 0, 1, 1], [], []>} : vector<2x64xf32>, vector<64x4xf32>, vector<2x4xf32> -> vector<2x4xf32>
    %cst_66 = arith.constant 0.000000e+00 : f32
    %50 = vector.broadcast %cst_66 : f32 to vector<2x4xf32>
    %51 = arith.maximumf %49, %50 : vector<2x4xf32>
    %c0_67 = arith.constant 0 : index
    %c0_68 = arith.constant 0 : index
    %52 = vector.load %arg9[%c0_67, %c0_68] : memref<4x64xf32, #tpu.memory_space<vmem>>, vector<4x64xf32>
    %cst_69 = arith.constant dense<0.000000e+00> : vector<2x64xf32>
    %53 = tpu.matmul %51, %52, %cst_69 {dimension_numbers = #tpu.dot_dimension_numbers<[1], [0], [0], [1], [0, 0, 1, 1], [], []>} : vector<2x4xf32>, vector<4x64xf32>, vector<2x64xf32> -> vector<2x64xf32>
    %54 = arith.negf %53 : vector<2x64xf32>
    %55 = math.exp %54 : vector<2x64xf32>
    %cst_70 = arith.constant 1.000000e+00 : f32
    %56 = vector.broadcast %cst_70 : f32 to vector<2x64xf32>
    %57 = arith.addf %56, %55 : vector<2x64xf32>
    %58 = arith.divf %56, %57 : vector<2x64xf32>
    %59 = vector.shape_cast %58 : vector<2x64xf32> to vector<2x1x64xf32>
    %60 = vector.broadcast %59 : vector<2x1x64xf32> to vector<2x64x64xf32>
    %61 = arith.mulf %44, %60 : vector<2x64x64xf32>
    %62 = arith.addf %61, %0 : vector<2x64x64xf32>
    %cst_71 = arith.constant 0.000000e+00 : f32
    %63 = vector.broadcast %cst_71 : f32 to vector<2x64x64xf32>
    %64 = arith.maximumf %62, %63 : vector<2x64x64xf32>
    %c0_72 = arith.constant 0 : index
    %c0_73 = arith.constant 0 : index
    %c0_74 = arith.constant 0 : index
    %65 = vector.load %arg10[%c0_72, %c0_73, %c0_74] : memref<2x64x64xf32, #tpu.memory_space<vmem>>, vector<2x64x64xf32>
    tpu.vector_store %arg10[%c0_72, %c0_73, %c0_74], %64 {strides = array<i32>} : memref<2x64x64xf32, #tpu.memory_space<vmem>>, vector<2x64x64xf32>,
    return
  }
  func.func @transform_0(%arg0: i32) -> (i32, i32, i32) {
    %c0_i32 = arith.constant 0 : i32
    %c0_i32_0 = arith.constant 0 : i32
    %c0_i32_1 = arith.constant 0 : i32
    return %arg0, %c0_i32, %c0_i32_0 : i32, i32, i32
  }
  func.func @transform_1(%arg0: i32) -> (i32, i32) {
    %c0_i32 = arith.constant 0 : i32
    %c0_i32_0 = arith.constant 0 : i32
    %c0_i32_1 = arith.constant 0 : i32
    return %c0_i32, %c0_i32_0 : i32, i32
  }
  func.func @transform_2(%arg0: i32) -> (i32, i32) {
    %c0_i32 = arith.constant 0 : i32
    %c0_i32_0 = arith.constant 0 : i32
    %c0_i32_1 = arith.constant 0 : i32
    return %c0_i32, %c0_i32_0 : i32, i32
  }
  func.func @transform_3(%arg0: i32) -> (i32, i32) {
    %c0_i32 = arith.constant 0 : i32
    %c0_i32_0 = arith.constant 0 : i32
    %c0_i32_1 = arith.constant 0 : i32
    return %c0_i32, %c0_i32_0 : i32, i32
  }
  func.func @transform_4(%arg0: i32) -> (i32, i32) {
    %c0_i32 = arith.constant 0 : i32
    %c0_i32_0 = arith.constant 0 : i32
    %c0_i32_1 = arith.constant 0 : i32
    return %c0_i32, %c0_i32_0 : i32, i32
  }
  func.func @transform_5(%arg0: i32) -> (i32, i32) {
    %c0_i32 = arith.constant 0 : i32
    %c0_i32_0 = arith.constant 0 : i32
    %c0_i32_1 = arith.constant 0 : i32
    return %c0_i32, %c0_i32_0 : i32, i32
  }
  func.func @transform_6(%arg0: i32) -> (i32, i32) {
    %c0_i32 = arith.constant 0 : i32
    %c0_i32_0 = arith.constant 0 : i32
    %c0_i32_1 = arith.constant 0 : i32
    return %c0_i32, %c0_i32_0 : i32, i32
  }
  func.func @transform_7(%arg0: i32) -> (i32, i32) {
    %c0_i32 = arith.constant 0 : i32
    %c0_i32_0 = arith.constant 0 : i32
    %c0_i32_1 = arith.constant 0 : i32
    return %c0_i32, %c0_i32_0 : i32, i32
  }
  func.func @transform_8(%arg0: i32) -> (i32, i32) {
    %c0_i32 = arith.constant 0 : i32
    %c0_i32_0 = arith.constant 0 : i32
    %c0_i32_1 = arith.constant 0 : i32
    return %c0_i32, %c0_i32_0 : i32, i32
  }
  func.func @transform_9(%arg0: i32) -> (i32, i32, i32) {
    %c0_i32 = arith.constant 0 : i32
    %c0_i32_0 = arith.constant 0 : i32
    %c0_i32_1 = arith.constant 0 : i32
    return %arg0, %c0_i32, %c0_i32_0 : i32, i32, i32
  }
}

</mosaic_0001>

<llo_original>
// kernel: tpu_custom_call.1
$region0: #{tpu_custom_call.1}
  #allocation0 [shape = 'u32[]', space=smem, size = 0x4, offset = 0x4, fixed_abs, tag = 'smem constant byte address 0x4 - core index']
  #allocation1 [shape = 'u32[144,128]{1,0:T(1,128)}', space=vmem, size = 0x12000, scoped, tag = 'internal scratch']
  #allocation2 [shape = 'f32[2,10,10,16]{3,2,1,0:T(8,128)}', space=vmem, size = 0x28000, scoped, tag = 'scratch operand']
  %s0 = inlined_call_operand.vmem [shape: f32[2,64,64], index: 0, kind: input, shape index: {}]
  %s1 = inlined_call_operand.vmem [shape: f32[64,16], index: 1, kind: input, shape index: {}]
  %s2 = inlined_call_operand.vmem [shape: f32[1,16], index: 2, kind: input, shape index: {}]
  %s3 = inlined_call_operand.vmem [shape: f32[144,16], index: 3, kind: input, shape index: {}]
  %s4 = inlined_call_operand.vmem [shape: f32[1,16], index: 4, kind: input, shape index: {}]
  %s5 = inlined_call_operand.vmem [shape: f32[16,64], index: 5, kind: input, shape index: {}]
  %s6 = inlined_call_operand.vmem [shape: f32[1,64], index: 6, kind: input, shape index: {}]
  %s7 = inlined_call_operand.vmem [shape: f32[64,4], index: 7, kind: input, shape index: {}]
  %s8 = inlined_call_operand.vmem [shape: f32[4,64], index: 8, kind: input, shape index: {}]
  %s9 = inlined_call_operand.hbm [shape: f32[2,64,64], index: 9, kind: output, shape index: {}]
  %s10 = sld [smem:[#allocation0]]
  $region46: #{tpu_custom_call.1} parent=0
    _
  %s12 = ssub.s32 1, %s10
  %s13 = scalar_select 0, %s12, %s10
  $region1: #{tpu_custom_call.1} parent=0
    #allocation3 [shape = 'u8[65536]{0}', space=vmem, size = 0x10000, scoped, tag = 'output window, operand 0, single buffered']
    #allocation4 [shape = 's32[1]{0}', space=sflag, size = 0x4, scoped, tag = 'scoped memory for tpu_custom_call.1']
    %14 = vsyncpa [#allocation4], 0
    // Predicated region
    $region2: #{tpu_custom_call.1} parent=1 // pred_check
      _
    $region3: #{tpu_custom_call.1} parent=1 // pred_check_branch
      %16 = sbr.rel (0) target = $region5
    $region4: #{tpu_custom_call.1} parent=1 // pred_region
      _
    $region5: #{tpu_custom_call.1} parent=1 // pred_fallthru
      _
    // Predicated region
    $region6: #{tpu_custom_call.1} parent=1 // pred_check
      _
    $region7: #{tpu_custom_call.1} parent=1 // pred_check_branch
      %18 = sbr.rel (0) target = $region9
    $region8: #{tpu_custom_call.1} parent=1 // pred_region
      _
    $region9: #{tpu_custom_call.1} parent=1 // pred_fallthru
      _
    // Predicated region
    $region10: #{tpu_custom_call.1} parent=1 // pred_check
      _
    $region11: #{tpu_custom_call.1} parent=1 // pred_check_branch
      %20 = sbr.rel (0) target = $region13
    $region12: #{tpu_custom_call.1} parent=1 // pred_region
      _
    $region13: #{tpu_custom_call.1} parent=1 // pred_fallthru
      _
    // Predicated region
    $region14: #{tpu_custom_call.1} parent=1 // pred_check
      _
    $region15: #{tpu_custom_call.1} parent=1 // pred_check_branch
      %22 = sbr.rel (0) target = $region17
    $region16: #{tpu_custom_call.1} parent=1 // pred_region
      _
    $region17: #{tpu_custom_call.1} parent=1 // pred_fallthru
      _
    // Predicated region
    $region18: #{tpu_custom_call.1} parent=1 // pred_check
      _
    $region19: #{tpu_custom_call.1} parent=1 // pred_check_branch
      %24 = sbr.rel (0) target = $region21
    $region20: #{tpu_custom_call.1} parent=1 // pred_region
      _
    $region21: #{tpu_custom_call.1} parent=1 // pred_fallthru
      _
    // Predicated region
    $region22: #{tpu_custom_call.1} parent=1 // pred_check
      _
    $region23: #{tpu_custom_call.1} parent=1 // pred_check_branch
      %26 = sbr.rel (0) target = $region25
    $region24: #{tpu_custom_call.1} parent=1 // pred_region
      _
    $region25: #{tpu_custom_call.1} parent=1 // pred_fallthru
      _
    // Predicated region
    $region26: #{tpu_custom_call.1} parent=1 // pred_check
      _
    $region27: #{tpu_custom_call.1} parent=1 // pred_check_branch
      %28 = sbr.rel (0) target = $region29
    $region28: #{tpu_custom_call.1} parent=1 // pred_region
      _
    $region29: #{tpu_custom_call.1} parent=1 // pred_fallthru
      _
    // Predicated region
    $region30: #{tpu_custom_call.1} parent=1 // pred_check
      _
    $region31: #{tpu_custom_call.1} parent=1 // pred_check_branch
      %30 = sbr.rel (0) target = $region33
    $region32: #{tpu_custom_call.1} parent=1 // pred_region
      _
    $region33: #{tpu_custom_call.1} parent=1 // pred_fallthru
      _
    // Predicated region
    $region34: #{tpu_custom_call.1} parent=1 // pred_check
      _
    $region35: #{tpu_custom_call.1} parent=1 // pred_check_branch
      %32 = sbr.rel (0) target = $region37
    $region36: #{tpu_custom_call.1} parent=1 // pred_region
      _
    $region37: #{tpu_custom_call.1} parent=1 // pred_fallthru
      _
    %v33 = vld [vmem:[%s0] sm:$0xff]
    %v34 = vld [vmem:[%s0 + $0x8] sm:$0xff]
    %v35 = vld [vmem:[%s0 + $0x10] sm:$0xff]
    %v36 = vld [vmem:[%s0 + $0x18] sm:$0xff]
    %v37 = vld [vmem:[%s0 + $0x20] sm:$0xff]
    %v38 = vld [vmem:[%s0 + $0x28] sm:$0xff]
    %v39 = vld [vmem:[%s0 + $0x30] sm:$0xff]
    %v40 = vld [vmem:[%s0 + $0x38] sm:$0xff]
    %v41 = vld [vmem:[%s0 + $0x40] sm:$0xff]
    %v42 = vld [vmem:[%s0 + $0x48] sm:$0xff]
    %v43 = vld [vmem:[%s0 + $0x50] sm:$0xff]
    %v44 = vld [vmem:[%s0 + $0x58] sm:$0xff]
    %v45 = vld [vmem:[%s0 + $0x60] sm:$0xff]
    %v46 = vld [vmem:[%s0 + $0x68] sm:$0xff]
    %v47 = vld [vmem:[%s0 + $0x70] sm:$0xff]
    %v48 = vld [vmem:[%s0 + $0x78] sm:$0xff]
    %v49 = vld [vmem:[%s1] sm:$0xff]
    %v50 = vld [vmem:[%s1 + $0x8] sm:$0xff]
    %v51 = vld [vmem:[%s1 + $0x10] sm:$0xff]
    %v52 = vld [vmem:[%s1 + $0x18] sm:$0xff]
    %v53 = vld [vmem:[%s1 + $0x20] sm:$0xff]
    %v54 = vld [vmem:[%s1 + $0x28] sm:$0xff]
    %v55 = vld [vmem:[%s1 + $0x30] sm:$0xff]
    %v56 = vld [vmem:[%s1 + $0x38] sm:$0xff]
    %v57 = vld [vmem:[%s2] sm:$0x1]
    %v59 = vlaneseq
    %v60 = vshrl.u32 %v59, 7
    %v61 = vsub.s32 0, %v60
    %v62 = vrot.slane %v57, %v61
    %vm64 = vcmask 523264
    %v66 = vsel %vm64, %v33, 0
    %v69 = vsel %vm64, %v34, 0
    %v72 = vsel %vm64, %v35, 0
    %v75 = vsel %vm64, %v36, 0
    %v78 = vsel %vm64, %v37, 0
    %v81 = vsel %vm64, %v38, 0
    %v84 = vsel %vm64, %v39, 0
    %v87 = vsel %vm64, %v40, 0
    %v90 = vsel %vm64, %v41, 0
    %v93 = vsel %vm64, %v42, 0
    %v96 = vsel %vm64, %v43, 0
    %v99 = vsel %vm64, %v44, 0
    %v102 = vsel %vm64, %v45, 0
    %v105 = vsel %vm64, %v46, 0
    %v108 = vsel %vm64, %v47, 0
    %v111 = vsel %vm64, %v48, 0
    %113 = vmatprep.subr.mxu0 0.0
    %114 = vmatpush1.msra.mxu0 %v49
    %115 = vmatprep.subr.mxu0 0.0
    %116 = vmatpush1.msra.mxu0 %v50
    %117 = vmatprep.subr.mxu0 0.0
    %118 = vmatpush1.msra.mxu0 %v51
    %119 = vmatprep.subr.mxu0 0.0
    %120 = vmatpush1.msra.mxu0 %v52
    %121 = vmatprep.subr.mxu0 0.0
    %122 = vmatpush1.msra.mxu0 %v53
    %123 = vmatprep.subr.mxu0 0.0
    %124 = vmatpush1.msra.mxu0 %v54
    %125 = vmatprep.subr.mxu0 0.0
    %126 = vmatpush1.msra.mxu0 %v55
    %127 = vmatprep.subr.mxu0 0.0
    %128 = vmatpush1.msra.mxu0 %v56
    %129 = vmatprep.subr.mxu0 0.0
    %130 = vmatpush1.msra.mxu0 0.0
    %131 = vmatprep.subr.mxu0 0.0
    %132 = vmatpush1.msra.mxu0 0.0
    %133 = vmatprep.subr.mxu0 0.0
    %134 = vmatpush1.msra.mxu0 0.0
    %135 = vmatprep.subr.mxu0 0.0
    %136 = vmatpush1.msra.mxu0 0.0
    %137 = vmatprep.subr.mxu0 0.0
    %138 = vmatpush1.msra.mxu0 0.0
    %139 = vmatprep.subr.mxu0 0.0
    %140 = vmatpush1.msra.mxu0 0.0
    %141 = vmatprep.subr.mxu0 0.0
    %142 = vmatpush1.msra.mxu0 0.0
    %143 = vmatprep.subr.mxu0 0.0
    %144 = vmatpush1.msra.mxu0 0.0
    %145 = vmatprep.subr.mxu0 0.0
    %146 = vmatpush1.msra.mxu0 0.0
    %147 = vmatprep.subr.mxu0 0.0
    %148 = vmatpush1.msra.mxu0 0.0
    %149 = vmatprep.subr.mxu0 0.0
    %150 = vmatpush1.msra.mxu0 0.0
    %151 = vmatprep.subr.mxu0 0.0
    %152 = vmatpush1.msra.mxu0 0.0
    %153 = vmatprep.subr.mxu0 0.0
    %154 = vmatpush1.msra.mxu0 0.0
    %155 = vmatprep.subr.mxu0 0.0
    %156 = vmatpush1.msra.mxu0 0.0
    %157 = vmatprep.subr.mxu0 0.0
    %158 = vmatpush1.msra.mxu0 0.0
    %159 = vmatprep.subr.mxu0 0.0
    %160 = vmatpush1.msra.mxu0 0.0
    %161 = vmatprep.subr.mxu0 0.0
    %162 = vmatpush1.msra.mxu0 0.0
    %163 = vmatprep.subr.mxu0 0.0
    %164 = vmatpush1.msra.mxu0 0.0
    %165 = vmatprep.subr.mxu0 0.0
    %166 = vmatpush1.msra.mxu0 0.0
    %167 = vmatprep.subr.mxu0 0.0
    %168 = vmatpush1.msra.mxu0 0.0
    %169 = vmatprep.subr.mxu0 0.0
    %170 = vmatpush1.msra.mxu0 0.0
    %171 = vmatprep.subr.mxu0 0.0
    %172 = vmatpush1.msra.mxu0 0.0
    %173 = vmatprep.subr.mxu0 0.0
    %174 = vmatpush1.msra.mxu0 0.0
    %175 = vmatprep.subr.mxu0 0.0
    %176 = vmatpush1.msra.mxu0 0.0
    %177 = vmatprep.mubr.f32.mxu0 0.0
    %178 = vmatmul.mubr.f32.gmra.mrb[0].mxu0 %v66
    %v179 = vpop.f32.mrb[0].mxu0
    %v180 = vadd.f32 %v62, %v179
    %v181 = vpop.f32.mrb[0].mxu0
    %182 = vmatprep.mubr.f32.mxu0 0.0
    %183 = vmatmul.mubr.f32.gmra.mrb[0].mxu0 %v69
    %v184 = vpop.f32.mrb[0].mxu0
    %v185 = vadd.f32 %v62, %v184
    %v186 = vpop.f32.mrb[0].mxu0
    %187 = vmatprep.mubr.f32.mxu0 0.0
    %188 = vmatmul.mubr.f32.gmra.mrb[0].mxu0 %v72
    %v189 = vpop.f32.mrb[0].mxu0
    %v190 = vadd.f32 %v62, %v189
    %v191 = vpop.f32.mrb[0].mxu0
    %192 = vmatprep.mubr.f32.mxu0 0.0
    %193 = vmatmul.mubr.f32.gmra.mrb[0].mxu0 %v75
    %v194 = vpop.f32.mrb[0].mxu0
    %v195 = vadd.f32 %v62, %v194
    %v196 = vpop.f32.mrb[0].mxu0
    %197 = vmatprep.mubr.f32.mxu0 0.0
    %198 = vmatmul.mubr.f32.gmra.mrb[0].mxu0 %v78
    %v199 = vpop.f32.mrb[0].mxu0
    %v200 = vadd.f32 %v62, %v199
    %v201 = vpop.f32.mrb[0].mxu0
    %202 = vmatprep.mubr.f32.mxu0 0.0
    %203 = vmatmul.mubr.f32.gmra.mrb[0].mxu0 %v81
    %v204 = vpop.f32.mrb[0].mxu0
    %v205 = vadd.f32 %v62, %v204
    %v206 = vpop.f32.mrb[0].mxu0
    %207 = vmatprep.mubr.f32.mxu0 0.0
    %208 = vmatmul.mubr.f32.gmra.mrb[0].mxu0 %v84
    %v209 = vpop.f32.mrb[0].mxu0
    %v210 = vadd.f32 %v62, %v209
    %v211 = vpop.f32.mrb[0].mxu0
    %212 = vmatprep.mubr.f32.mxu0 0.0
    %213 = vmatmul.mubr.f32.gmra.mrb[0].mxu0 %v87
    %v214 = vpop.f32.mrb[0].mxu0
    %v215 = vadd.f32 %v62, %v214
    %v216 = vpop.f32.mrb[0].mxu0
    %217 = vmatprep.mubr.f32.mxu0 0.0
    %218 = vmatmul.mubr.f32.gmra.mrb[0].mxu0 %v90
    %v219 = vpop.f32.mrb[0].mxu0
    %v220 = vadd.f32 %v62, %v219
    %v221 = vpop.f32.mrb[0].mxu0
    %222 = vmatprep.mubr.f32.mxu0 0.0
    %223 = vmatmul.mubr.f32.gmra.mrb[0].mxu0 %v93
    %v224 = vpop.f32.mrb[0].mxu0
    %v225 = vadd.f32 %v62, %v224
    %v226 = vpop.f32.mrb[0].mxu0
    %227 = vmatprep.mubr.f32.mxu0 0.0
    %228 = vmatmul.mubr.f32.gmra.mrb[0].mxu0 %v96
    %v229 = vpop.f32.mrb[0].mxu0
    %v230 = vadd.f32 %v62, %v229
    %v231 = vpop.f32.mrb[0].mxu0
    %232 = vmatprep.mubr.f32.mxu0 0.0
    %233 = vmatmul.mubr.f32.gmra.mrb[0].mxu0 %v99
    %v234 = vpop.f32.mrb[0].mxu0
    %v235 = vadd.f32 %v62, %v234
    %v236 = vpop.f32.mrb[0].mxu0
    %237 = vmatprep.mubr.f32.mxu0 0.0
    %238 = vmatmul.mubr.f32.gmra.mrb[0].mxu0 %v102
    %v239 = vpop.f32.mrb[0].mxu0
    %v240 = vadd.f32 %v62, %v239
    %v241 = vpop.f32.mrb[0].mxu0
    %242 = vmatprep.mubr.f32.mxu0 0.0
    %243 = vmatmul.mubr.f32.gmra.mrb[0].mxu0 %v105
    %v244 = vpop.f32.mrb[0].mxu0
    %v245 = vadd.f32 %v62, %v244
    %v246 = vpop.f32.mrb[0].mxu0
    %247 = vmatprep.mubr.f32.mxu0 0.0
    %248 = vmatmul.mubr.f32.gmra.mrb[0].mxu0 %v108
    %v249 = vpop.f32.mrb[0].mxu0
    %v250 = vadd.f32 %v62, %v249
    %v251 = vpop.f32.mrb[0].mxu0
    %252 = vmatprep.mubr.f32.mxu0 0.0
    %253 = vmatmul.mubr.f32.gmra.mrb[0].mxu0 %v111
    %v254 = vpop.f32.mrb[0].mxu0
    %v255 = vadd.f32 %v62, %v254
    %v256 = vpop.f32.mrb[0].mxu0
    %257 = vdwg.mxu0
    %v258 = vmax.f32 %v180, 0.0
    %v259 = vmax.f32 %v185, 0.0
    %v260 = vmax.f32 %v190, 0.0
    %v261 = vmax.f32 %v195, 0.0
    %v262 = vmax.f32 %v200, 0.0
    %v263 = vmax.f32 %v205, 0.0
    %v264 = vmax.f32 %v210, 0.0
    %v265 = vmax.f32 %v215, 0.0
    %v266 = vmax.f32 %v220, 0.0
    %v267 = vmax.f32 %v225, 0.0
    %v268 = vmax.f32 %v230, 0.0
    %v269 = vmax.f32 %v235, 0.0
    %v270 = vmax.f32 %v240, 0.0
    %v271 = vmax.f32 %v245, 0.0
    %v272 = vmax.f32 %v250, 0.0
    %v273 = vmax.f32 %v255, 0.0
    %vm274 = vcmask 130048
    %275 = vst.msk [vmem:[#allocation2] sm:$0xff] %vm274, 0.0
    %vm276 = vcmask 123904
    %277 = vst.msk [vmem:[#allocation2 + $0x8] sm:$0x3] %vm276, 0.0
    %278 = vst.msk [vmem:[#allocation2 + $0x10] sm:$0xff] %vm274, 0.0
    %279 = vst.msk [vmem:[#allocation2 + $0x18] sm:$0x3] %vm276, 0.0
    %280 = vst.msk [vmem:[#allocation2 + $0x20] sm:$0xff] %vm274, 0.0
    %281 = vst.msk [vmem:[#allocation2 + $0x28] sm:$0x3] %vm276, 0.0
    %282 = vst.msk [vmem:[#allocation2 + $0x30] sm:$0xff] %vm274, 0.0
    %283 = vst.msk [vmem:[#allocation2 + $0x38] sm:$0x3] %vm276, 0.0
    %284 = vst.msk [vmem:[#allocation2 + $0x40] sm:$0xff] %vm274, 0.0
    %285 = vst.msk [vmem:[#allocation2 + $0x48] sm:$0x3] %vm276, 0.0
    %286 = vst.msk [vmem:[#allocation2 + $0x50] sm:$0xff] %vm274, 0.0
    %287 = vst.msk [vmem:[#allocation2 + $0x58] sm:$0x3] %vm276, 0.0
    %288 = vst.msk [vmem:[#allocation2 + $0x60] sm:$0xff] %vm274, 0.0
    %289 = vst.msk [vmem:[#allocation2 + $0x68] sm:$0x3] %vm276, 0.0
    %290 = vst.msk [vmem:[#allocation2 + $0x70] sm:$0xff] %vm274, 0.0
    %291 = vst.msk [vmem:[#allocation2 + $0x78] sm:$0x3] %vm276, 0.0
    %292 = vst.msk [vmem:[#allocation2 + $0x80] sm:$0xff] %vm274, 0.0
    %293 = vst.msk [vmem:[#allocation2 + $0x88] sm:$0x3] %vm276, 0.0
    %294 = vst.msk [vmem:[#allocation2 + $0x90] sm:$0xff] %vm274, 0.0
    %295 = vst.msk [vmem:[#allocation2 + $0x98] sm:$0x3] %vm276, 0.0
    %296 = vst.msk [vmem:[#allocation2 + $0xa0] sm:$0xff] %vm274, 0.0
    %297 = vst.msk [vmem:[#allocation2 + $0xa8] sm:$0x3] %vm276, 0.0
    %298 = vst.msk [vmem:[#allocation2 + $0xb0] sm:$0xff] %vm274, 0.0
    %299 = vst.msk [vmem:[#allocation2 + $0xb8] sm:$0x3] %vm276, 0.0
    %300 = vst.msk [vmem:[#allocation2 + $0xc0] sm:$0xff] %vm274, 0.0
    %301 = vst.msk [vmem:[#allocation2 + $0xc8] sm:$0x3] %vm276, 0.0
    %302 = vst.msk [vmem:[#allocation2 + $0xd0] sm:$0xff] %vm274, 0.0
    %303 = vst.msk [vmem:[#allocation2 + $0xd8] sm:$0x3] %vm276, 0.0
    %304 = vst.msk [vmem:[#allocation2 + $0xe0] sm:$0xff] %vm274, 0.0
    %305 = vst.msk [vmem:[#allocation2 + $0xe8] sm:$0x3] %vm276, 0.0
    %306 = vst.msk [vmem:[#allocation2 + $0xf0] sm:$0xff] %vm274, 0.0
    %307 = vst.msk [vmem:[#allocation2 + $0xf8] sm:$0x3] %vm276, 0.0
    %308 = vst.msk [vmem:[#allocation2 + $0x100] sm:$0xff] %vm274, 0.0
    %309 = vst.msk [vmem:[#allocation2 + $0x108] sm:$0x3] %vm276, 0.0
    %310 = vst.msk [vmem:[#allocation2 + $0x110] sm:$0xff] %vm274, 0.0
    %311 = vst.msk [vmem:[#allocation2 + $0x118] sm:$0x3] %vm276, 0.0
    %312 = vst.msk [vmem:[#allocation2 + $0x120] sm:$0xff] %vm274, 0.0
    %313 = vst.msk [vmem:[#allocation2 + $0x128] sm:$0x3] %vm276, 0.0
    %314 = vst.msk [vmem:[#allocation2 + $0x130] sm:$0xff] %vm274, 0.0
    %315 = vst.msk [vmem:[#allocation2 + $0x138] sm:$0x3] %vm276, 0.0
    %s316 = scalar_lea.vmem [#allocation2], 16
    %317 = vst.msk [vmem:[%s316 + $0x1] sm:$0xff] %vm274, %v258
    %318 = vst.msk [vmem:[%s316 + $0x11] sm:$0xff] %vm274, %v259
    %319 = vst.msk [vmem:[%s316 + $0x21] sm:$0xff] %vm274, %v260
    %320 = vst.msk [vmem:[%s316 + $0x31] sm:$0xff] %vm274, %v261
    %321 = vst.msk [vmem:[%s316 + $0x41] sm:$0xff] %vm274, %v262
    %322 = vst.msk [vmem:[%s316 + $0x51] sm:$0xff] %vm274, %v263
    %323 = vst.msk [vmem:[%s316 + $0x61] sm:$0xff] %vm274, %v264
    %324 = vst.msk [vmem:[%s316 + $0x71] sm:$0xff] %vm274, %v265
    %325 = vst.msk [vmem:[%s316 + $0xa1] sm:$0xff] %vm274, %v266
    %326 = vst.msk [vmem:[%s316 + $0xb1] sm:$0xff] %vm274, %v267
    %327 = vst.msk [vmem:[%s316 + $0xc1] sm:$0xff] %vm274, %v268
    %328 = vst.msk [vmem:[%s316 + $0xd1] sm:$0xff] %vm274, %v269
    %329 = vst.msk [vmem:[%s316 + $0xe1] sm:$0xff] %vm274, %v270
    %330 = vst.msk [vmem:[%s316 + $0xf1] sm:$0xff] %vm274, %v271
    %331 = vst.msk [vmem:[%s316 + $0x101] sm:$0xff] %vm274, %v272
    %332 = vst.msk [vmem:[%s316 + $0x111] sm:$0xff] %vm274, %v273
    %v333 = vld [vmem:[#allocation2] sm:$0xff]
    %v334 = vld [vmem:[#allocation2 + $0x10] sm:$0xff]
    %v335 = vld [vmem:[#allocation2 + $0x20] sm:$0xff]
    %v336 = vld [vmem:[#allocation2 + $0x30] sm:$0xff]
    %v337 = vld [vmem:[#allocation2 + $0x40] sm:$0xff]
    %v338 = vld [vmem:[#allocation2 + $0x50] sm:$0xff]
    %v339 = vld [vmem:[#allocation2 + $0x60] sm:$0xff]
    %v340 = vld [vmem:[#allocation2 + $0x70] sm:$0xff]
    %v341 = vld [vmem:[#allocation2 + $0xa0] sm:$0xff]
    %v342 = vld [vmem:[#allocation2 + $0xb0] sm:$0xff]
    %v343 = vld [vmem:[#allocation2 + $0xc0] sm:$0xff]
    %v344 = vld [vmem:[#allocation2 + $0xd0] sm:$0xff]
    %v345 = vld [vmem:[#allocation2 + $0xe0] sm:$0xff]
    %v346 = vld [vmem:[#allocation2 + $0xf0] sm:$0xff]
    %v347 = vld [vmem:[#allocation2 + $0x100] sm:$0xff]
    %v348 = vld [vmem:[#allocation2 + $0x110] sm:$0xff]
    %v349 = vld [vmem:[#allocation2 + $0x1] sm:$0xff]
    %v350 = vld [vmem:[#allocation2 + $0x11] sm:$0xff]
    %v351 = vld [vmem:[#allocation2 + $0x21] sm:$0xff]
    %v352 = vld [vmem:[#allocation2 + $0x31] sm:$0xff]
    %v353 = vld [vmem:[#allocation2 + $0x41] sm:$0xff]
    %v354 = vld [vmem:[#allocation2 + $0x51] sm:$0xff]
    %v355 = vld [vmem:[#allocation2 + $0x61] sm:$0xff]
    %v356 = vld [vmem:[#allocation2 + $0x71] sm:$0xff]
    %v357 = vld [vmem:[#allocation2 + $0xa1] sm:$0xff]
    %v358 = vld [vmem:[#allocation2 + $0xb1] sm:$0xff]
    %v359 = vld [vmem:[#allocation2 + $0xc1] sm:$0xff]
    %v360 = vld [vmem:[#allocation2 + $0xd1] sm:$0xff]
    %v361 = vld [vmem:[#allocation2 + $0xe1] sm:$0xff]
    %v362 = vld [vmem:[#allocation2 + $0xf1] sm:$0xff]
    %v363 = vld [vmem:[#allocation2 + $0x101] sm:$0xff]
    %v364 = vld [vmem:[#allocation2 + $0x111] sm:$0xff]
    %v365 = vld [vmem:[#allocation2 + $0x2] sm:$0xff]
    %v366 = vld [vmem:[#allocation2 + $0x12] sm:$0xff]
    %v367 = vld [vmem:[#allocation2 + $0x22] sm:$0xff]
    %v368 = vld [vmem:[#allocation2 + $0x32] sm:$0xff]
    %v369 = vld [vmem:[#allocation2 + $0x42] sm:$0xff]
    %v370 = vld [vmem:[#allocation2 + $0x52] sm:$0xff]
    %v371 = vld [vmem:[#allocation2 + $0x62] sm:$0xff]
    %v372 = vld [vmem:[#allocation2 + $0x72] sm:$0xff]
    %v373 = vld [vmem:[#allocation2 + $0xa2] sm:$0xff]
    %v374 = vld [vmem:[#allocation2 + $0xb2] sm:$0xff]
    %v375 = vld [vmem:[#allocation2 + $0xc2] sm:$0xff]
    %v376 = vld [vmem:[#allocation2 + $0xd2] sm:$0xff]
    %v377 = vld [vmem:[#allocation2 + $0xe2] sm:$0xff]
    %v378 = vld [vmem:[#allocation2 + $0xf2] sm:$0xff]
    %v379 = vld [vmem:[#allocation2 + $0x102] sm:$0xff]
    %v380 = vld [vmem:[#allocation2 + $0x112] sm:$0xff]
    %v381 = vld [vmem:[%s316] sm:$0xff]
    %v382 = vld [vmem:[%s316 + $0x10] sm:$0xff]
    %v383 = vld [vmem:[%s316 + $0x20] sm:$0xff]
    %v384 = vld [vmem:[%s316 + $0x30] sm:$0xff]
    %v385 = vld [vmem:[%s316 + $0x40] sm:$0xff]
    %v386 = vld [vmem:[%s316 + $0x50] sm:$0xff]
    %v387 = vld [vmem:[%s316 + $0x60] sm:$0xff]
    %v388 = vld [vmem:[%s316 + $0x70] sm:$0xff]
    %v389 = vld [vmem:[%s316 + $0xa0] sm:$0xff]
    %v390 = vld [vmem:[%s316 + $0xb0] sm:$0xff]
    %v391 = vld [vmem:[%s316 + $0xc0] sm:$0xff]
    %v392 = vld [vmem:[%s316 + $0xd0] sm:$0xff]
    %v393 = vld [vmem:[%s316 + $0xe0] sm:$0xff]
    %v394 = vld [vmem:[%s316 + $0xf0] sm:$0xff]
    %v395 = vld [vmem:[%s316 + $0x100] sm:$0xff]
    %v396 = vld [vmem:[%s316 + $0x110] sm:$0xff]
    %v397 = vld [vmem:[%s316 + $0x1] sm:$0xff]
    %v398 = vld [vmem:[%s316 + $0x11] sm:$0xff]
    %v399 = vld [vmem:[%s316 + $0x21] sm:$0xff]
    %v400 = vld [vmem:[%s316 + $0x31] sm:$0xff]
    %v401 = vld [vmem:[%s316 + $0x41] sm:$0xff]
    %v402 = vld [vmem:[%s316 + $0x51] sm:$0xff]
    %v403 = vld [vmem:[%s316 + $0x61] sm:$0xff]
    %v404 = vld [vmem:[%s316 + $0x71] sm:$0xff]
    %v405 = vld [vmem:[%s316 + $0xa1] sm:$0xff]
    %v406 = vld [vmem:[%s316 + $0xb1] sm:$0xff]
    %v407 = vld [vmem:[%s316 + $0xc1] sm:$0xff]
    %v408 = vld [vmem:[%s316 + $0xd1] sm:$0xff]
    %v409 = vld [vmem:[%s316 + $0xe1] sm:$0xff]
    %v410 = vld [vmem:[%s316 + $0xf1] sm:$0xff]
    %v411 = vld [vmem:[%s316 + $0x101] sm:$0xff]
    %v412 = vld [vmem:[%s316 + $0x111] sm:$0xff]
    %v413 = vld [vmem:[%s316 + $0x2] sm:$0xff]
    %v414 = vld [vmem:[%s316 + $0x12] sm:$0xff]
    %v415 = vld [vmem:[%s316 + $0x22] sm:$0xff]
    %v416 = vld [vmem:[%s316 + $0x32] sm:$0xff]
    %v417 = vld [vmem:[%s316 + $0x42] sm:$0xff]
    %v418 = vld [vmem:[%s316 + $0x52] sm:$0xff]
    %v419 = vld [vmem:[%s316 + $0x62] sm:$0xff]
    %v420 = vld [vmem:[%s316 + $0x72] sm:$0xff]
    %v421 = vld [vmem:[%s316 + $0xa2] sm:$0xff]
    %v422 = vld [vmem:[%s316 + $0xb2] sm:$0xff]
    %v423 = vld [vmem:[%s316 + $0xc2] sm:$0xff]
    %v424 = vld [vmem:[%s316 + $0xd2] sm:$0xff]
    %v425 = vld [vmem:[%s316 + $0xe2] sm:$0xff]
    %v426 = vld [vmem:[%s316 + $0xf2] sm:$0xff]
    %v427 = vld [vmem:[%s316 + $0x102] sm:$0xff]
    %v428 = vld [vmem:[%s316 + $0x112] sm:$0xff]
    %s429 = scalar_lea.vmem [#allocation2], 32
    %v430 = vld [vmem:[%s429] sm:$0xff]
    %v431 = vld [vmem:[%s429 + $0x10] sm:$0xff]
    %v432 = vld [vmem:[%s429 + $0x20] sm:$0xff]
    %v433 = vld [vmem:[%s429 + $0x30] sm:$0xff]
    %v434 = vld [vmem:[%s429 + $0x40] sm:$0xff]
    %v435 = vld [vmem:[%s429 + $0x50] sm:$0xff]
    %v436 = vld [vmem:[%s429 + $0x60] sm:$0xff]
    %v437 = vld [vmem:[%s429 + $0x70] sm:$0xff]
    %v438 = vld [vmem:[%s429 + $0xa0] sm:$0xff]
    %v439 = vld [vmem:[%s429 + $0xb0] sm:$0xff]
    %v440 = vld [vmem:[%s429 + $0xc0] sm:$0xff]
    %v441 = vld [vmem:[%s429 + $0xd0] sm:$0xff]
    %v442 = vld [vmem:[%s429 + $0xe0] sm:$0xff]
    %v443 = vld [vmem:[%s429 + $0xf0] sm:$0xff]
    %v444 = vld [vmem:[%s429 + $0x100] sm:$0xff]
    %v445 = vld [vmem:[%s429 + $0x110] sm:$0xff]
    %v446 = vld [vmem:[%s429 + $0x1] sm:$0xff]
    %v447 = vld [vmem:[%s429 + $0x11] sm:$0xff]
    %v448 = vld [vmem:[%s429 + $0x21] sm:$0xff]
    %v449 = vld [vmem:[%s429 + $0x31] sm:$0xff]
    %v450 = vld [vmem:[%s429 + $0x41] sm:$0xff]
    %v451 = vld [vmem:[%s429 + $0x51] sm:$0xff]
    %v452 = vld [vmem:[%s429 + $0x61] sm:$0xff]
    %v453 = vld [vmem:[%s429 + $0x71] sm:$0xff]
    %v454 = vld [vmem:[%s429 + $0xa1] sm:$0xff]
    %v455 = vld [vmem:[%s429 + $0xb1] sm:$0xff]
    %v456 = vld [vmem:[%s429 + $0xc1] sm:$0xff]
    %v457 = vld [vmem:[%s429 + $0xd1] sm:$0xff]
    %v458 = vld [vmem:[%s429 + $0xe1] sm:$0xff]
    %v459 = vld [vmem:[%s429 + $0xf1] sm:$0xff]
    %v460 = vld [vmem:[%s429 + $0x101] sm:$0xff]
    %v461 = vld [vmem:[%s429 + $0x111] sm:$0xff]
    %v462 = vld [vmem:[%s429 + $0x2] sm:$0xff]
    %v463 = vld [vmem:[%s429 + $0x12] sm:$0xff]
    %v464 = vld [vmem:[%s429 + $0x22] sm:$0xff]
    %v465 = vld [vmem:[%s429 + $0x32] sm:$0xff]
    %v466 = vld [vmem:[%s429 + $0x42] sm:$0xff]
    %v467 = vld [vmem:[%s429 + $0x52] sm:$0xff]
    %v468 = vld [vmem:[%s429 + $0x62] sm:$0xff]
    %v469 = vld [vmem:[%s429 + $0x72] sm:$0xff]
    %v470 = vld [vmem:[%s429 + $0xa2] sm:$0xff]
    %v471 = vld [vmem:[%s429 + $0xb2] sm:$0xff]
    %v472 = vld [vmem:[%s429 + $0xc2] sm:$0xff]
    %v473 = vld [vmem:[%s429 + $0xd2] sm:$0xff]
    %v474 = vld [vmem:[%s429 + $0xe2] sm:$0xff]
    %v475 = vld [vmem:[%s429 + $0xf2] sm:$0xff]
    %v476 = vld [vmem:[%s429 + $0x102] sm:$0xff]
    %v477 = vld [vmem:[%s429 + $0x112] sm:$0xff]
    %494 = vrot.lane.b32.xlu0 %v349, 16
    %v495 = vpop.permute.xlu0 %494
    %496 = vrot.lane.b32.xlu0 %v350, 16
    %v497 = vpop.permute.xlu0 %496
    %498 = vrot.lane.b32.xlu0 %v351, 16
    %v499 = vpop.permute.xlu0 %498
    %500 = vrot.lane.b32.xlu0 %v352, 16
    %v501 = vpop.permute.xlu0 %500
    %502 = vrot.lane.b32.xlu0 %v353, 16
    %v503 = vpop.permute.xlu0 %502
    %504 = vrot.lane.b32.xlu0 %v354, 16
    %v505 = vpop.permute.xlu0 %504
    %506 = vrot.lane.b32.xlu0 %v355, 16
    %v507 = vpop.permute.xlu0 %506
    %508 = vrot.lane.b32.xlu0 %v356, 16
    %v509 = vpop.permute.xlu0 %508
    %510 = vrot.lane.b32.xlu0 %v357, 16
    %v511 = vpop.permute.xlu0 %510
    %512 = vrot.lane.b32.xlu0 %v358, 16
    %v513 = vpop.permute.xlu0 %512
    %514 = vrot.lane.b32.xlu0 %v359, 16
    %v515 = vpop.permute.xlu0 %514
    %516 = vrot.lane.b32.xlu0 %v360, 16
    %v517 = vpop.permute.xlu0 %516
    %518 = vrot.lane.b32.xlu0 %v361, 16
    %v519 = vpop.permute.xlu0 %518
    %520 = vrot.lane.b32.xlu0 %v362, 16
    %v521 = vpop.permute.xlu0 %520
    %522 = vrot.lane.b32.xlu0 %v363, 16
    %v523 = vpop.permute.xlu0 %522
    %524 = vrot.lane.b32.xlu0 %v364, 16
    %v525 = vpop.permute.xlu0 %524
    %558 = vrot.lane.b32.xlu0 %v365, 32
    %v559 = vpop.permute.xlu0 %558
    %560 = vrot.lane.b32.xlu0 %v366, 32
    %v561 = vpop.permute.xlu0 %560
    %562 = vrot.lane.b32.xlu0 %v367, 32
    %v563 = vpop.permute.xlu0 %562
    %564 = vrot.lane.b32.xlu0 %v368, 32
    %v565 = vpop.permute.xlu0 %564
    %566 = vrot.lane.b32.xlu0 %v369, 32
    %v567 = vpop.permute.xlu0 %566
    %568 = vrot.lane.b32.xlu0 %v370, 32
    %v569 = vpop.permute.xlu0 %568
    %570 = vrot.lane.b32.xlu0 %v371, 32
    %v571 = vpop.permute.xlu0 %570
    %572 = vrot.lane.b32.xlu0 %v372, 32
    %v573 = vpop.permute.xlu0 %572
    %574 = vrot.lane.b32.xlu0 %v373, 32
    %v575 = vpop.permute.xlu0 %574
    %576 = vrot.lane.b32.xlu0 %v374, 32
    %v577 = vpop.permute.xlu0 %576
    %578 = vrot.lane.b32.xlu0 %v375, 32
    %v579 = vpop.permute.xlu0 %578
    %580 = vrot.lane.b32.xlu0 %v376, 32
    %v581 = vpop.permute.xlu0 %580
    %582 = vrot.lane.b32.xlu0 %v377, 32
    %v583 = vpop.permute.xlu0 %582
    %584 = vrot.lane.b32.xlu0 %v378, 32
    %v585 = vpop.permute.xlu0 %584
    %586 = vrot.lane.b32.xlu0 %v379, 32
    %v587 = vpop.permute.xlu0 %586
    %588 = vrot.lane.b32.xlu0 %v380, 32
    %v589 = vpop.permute.xlu0 %588
    %622 = vrot.lane.b32.xlu0 %v381, 48
    %v623 = vpop.permute.xlu0 %622
    %624 = vrot.lane.b32.xlu0 %v382, 48
    %v625 = vpop.permute.xlu0 %624
    %626 = vrot.lane.b32.xlu0 %v383, 48
    %v627 = vpop.permute.xlu0 %626
    %628 = vrot.lane.b32.xlu0 %v384, 48
    %v629 = vpop.permute.xlu0 %628
    %630 = vrot.lane.b32.xlu0 %v385, 48
    %v631 = vpop.permute.xlu0 %630
    %632 = vrot.lane.b32.xlu0 %v386, 48
    %v633 = vpop.permute.xlu0 %632
    %634 = vrot.lane.b32.xlu0 %v387, 48
    %v635 = vpop.permute.xlu0 %634
    %636 = vrot.lane.b32.xlu0 %v388, 48
    %v637 = vpop.permute.xlu0 %636
    %638 = vrot.lane.b32.xlu0 %v389, 48
    %v639 = vpop.permute.xlu0 %638
    %640 = vrot.lane.b32.xlu0 %v390, 48
    %v641 = vpop.permute.xlu0 %640
    %642 = vrot.lane.b32.xlu0 %v391, 48
    %v643 = vpop.permute.xlu0 %642
    %644 = vrot.lane.b32.xlu0 %v392, 48
    %v645 = vpop.permute.xlu0 %644
    %646 = vrot.lane.b32.xlu0 %v393, 48
    %v647 = vpop.permute.xlu0 %646
    %648 = vrot.lane.b32.xlu0 %v394, 48
    %v649 = vpop.permute.xlu0 %648
    %650 = vrot.lane.b32.xlu0 %v395, 48
    %v651 = vpop.permute.xlu0 %650
    %652 = vrot.lane.b32.xlu0 %v396, 48
    %v653 = vpop.permute.xlu0 %652
    %686 = vrot.lane.b32.xlu0 %v397, 64
    %v687 = vpop.permute.xlu0 %686
    %688 = vrot.lane.b32.xlu0 %v398, 64
    %v689 = vpop.permute.xlu0 %688
    %690 = vrot.lane.b32.xlu0 %v399, 64
    %v691 = vpop.permute.xlu0 %690
    %692 = vrot.lane.b32.xlu0 %v400, 64
    %v693 = vpop.permute.xlu0 %692
    %694 = vrot.lane.b32.xlu0 %v401, 64
    %v695 = vpop.permute.xlu0 %694
    %696 = vrot.lane.b32.xlu0 %v402, 64
    %v697 = vpop.permute.xlu0 %696
    %698 = vrot.lane.b32.xlu0 %v403, 64
    %v699 = vpop.permute.xlu0 %698
    %700 = vrot.lane.b32.xlu0 %v404, 64
    %v701 = vpop.permute.xlu0 %700
    %702 = vrot.lane.b32.xlu0 %v405, 64
    %v703 = vpop.permute.xlu0 %702
    %704 = vrot.lane.b32.xlu0 %v406, 64
    %v705 = vpop.permute.xlu0 %704
    %706 = vrot.lane.b32.xlu0 %v407, 64
    %v707 = vpop.permute.xlu0 %706
    %708 = vrot.lane.b32.xlu0 %v408, 64
    %v709 = vpop.permute.xlu0 %708
    %710 = vrot.lane.b32.xlu0 %v409, 64
    %v711 = vpop.permute.xlu0 %710
    %712 = vrot.lane.b32.xlu0 %v410, 64
    %v713 = vpop.permute.xlu0 %712
    %714 = vrot.lane.b32.xlu0 %v411, 64
    %v715 = vpop.permute.xlu0 %714
    %716 = vrot.lane.b32.xlu0 %v412, 64
    %v717 = vpop.permute.xlu0 %716
    %750 = vrot.lane.b32.xlu0 %v413, 80
    %v751 = vpop.permute.xlu0 %750
    %752 = vrot.lane.b32.xlu0 %v414, 80
    %v753 = vpop.permute.xlu0 %752
    %754 = vrot.lane.b32.xlu0 %v415, 80
    %v755 = vpop.permute.xlu0 %754
    %756 = vrot.lane.b32.xlu0 %v416, 80
    %v757 = vpop.permute.xlu0 %756
    %758 = vrot.lane.b32.xlu0 %v417, 80
    %v759 = vpop.permute.xlu0 %758
    %760 = vrot.lane.b32.xlu0 %v418, 80
    %v761 = vpop.permute.xlu0 %760
    %762 = vrot.lane.b32.xlu0 %v419, 80
    %v763 = vpop.permute.xlu0 %762
    %764 = vrot.lane.b32.xlu0 %v420, 80
    %v765 = vpop.permute.xlu0 %764
    %766 = vrot.lane.b32.xlu0 %v421, 80
    %v767 = vpop.permute.xlu0 %766
    %768 = vrot.lane.b32.xlu0 %v422, 80
    %v769 = vpop.permute.xlu0 %768
    %770 = vrot.lane.b32.xlu0 %v423, 80
    %v771 = vpop.permute.xlu0 %770
    %772 = vrot.lane.b32.xlu0 %v424, 80
    %v773 = vpop.permute.xlu0 %772
    %774 = vrot.lane.b32.xlu0 %v425, 80
    %v775 = vpop.permute.xlu0 %774
    %776 = vrot.lane.b32.xlu0 %v426, 80
    %v777 = vpop.permute.xlu0 %776
    %778 = vrot.lane.b32.xlu0 %v427, 80
    %v779 = vpop.permute.xlu0 %778
    %780 = vrot.lane.b32.xlu0 %v428, 80
    %v781 = vpop.permute.xlu0 %780
    %814 = vrot.lane.b32.xlu0 %v430, 96
    %v815 = vpop.permute.xlu0 %814
    %816 = vrot.lane.b32.xlu0 %v431, 96
    %v817 = vpop.permute.xlu0 %816
    %818 = vrot.lane.b32.xlu0 %v432, 96
    %v819 = vpop.permute.xlu0 %818
    %820 = vrot.lane.b32.xlu0 %v433, 96
    %v821 = vpop.permute.xlu0 %820
    %822 = vrot.lane.b32.xlu0 %v434, 96
    %v823 = vpop.permute.xlu0 %822
    %824 = vrot.lane.b32.xlu0 %v435, 96
    %v825 = vpop.permute.xlu0 %824
    %826 = vrot.lane.b32.xlu0 %v436, 96
    %v827 = vpop.permute.xlu0 %826
    %828 = vrot.lane.b32.xlu0 %v437, 96
    %v829 = vpop.permute.xlu0 %828
    %830 = vrot.lane.b32.xlu0 %v438, 96
    %v831 = vpop.permute.xlu0 %830
    %832 = vrot.lane.b32.xlu0 %v439, 96
    %v833 = vpop.permute.xlu0 %832
    %834 = vrot.lane.b32.xlu0 %v440, 96
    %v835 = vpop.permute.xlu0 %834
    %836 = vrot.lane.b32.xlu0 %v441, 96
    %v837 = vpop.permute.xlu0 %836
    %838 = vrot.lane.b32.xlu0 %v442, 96
    %v839 = vpop.permute.xlu0 %838
    %840 = vrot.lane.b32.xlu0 %v443, 96
    %v841 = vpop.permute.xlu0 %840
    %842 = vrot.lane.b32.xlu0 %v444, 96
    %v843 = vpop.permute.xlu0 %842
    %844 = vrot.lane.b32.xlu0 %v445, 96
    %v845 = vpop.permute.xlu0 %844
    %878 = vrot.lane.b32.xlu0 %v446, 112
    %v879 = vpop.permute.xlu0 %878
    %880 = vrot.lane.b32.xlu0 %v447, 112
    %v881 = vpop.permute.xlu0 %880
    %882 = vrot.lane.b32.xlu0 %v448, 112
    %v883 = vpop.permute.xlu0 %882
    %884 = vrot.lane.b32.xlu0 %v449, 112
    %v885 = vpop.permute.xlu0 %884
    %886 = vrot.lane.b32.xlu0 %v450, 112
    %v887 = vpop.permute.xlu0 %886
    %888 = vrot.lane.b32.xlu0 %v451, 112
    %v889 = vpop.permute.xlu0 %888
    %890 = vrot.lane.b32.xlu0 %v452, 112
    %v891 = vpop.permute.xlu0 %890
    %892 = vrot.lane.b32.xlu0 %v453, 112
    %v893 = vpop.permute.xlu0 %892
    %894 = vrot.lane.b32.xlu0 %v454, 112
    %v895 = vpop.permute.xlu0 %894
    %896 = vrot.lane.b32.xlu0 %v455, 112
    %v897 = vpop.permute.xlu0 %896
    %898 = vrot.lane.b32.xlu0 %v456, 112
    %v899 = vpop.permute.xlu0 %898
    %900 = vrot.lane.b32.xlu0 %v457, 112
    %v901 = vpop.permute.xlu0 %900
    %902 = vrot.lane.b32.xlu0 %v458, 112
    %v903 = vpop.permute.xlu0 %902
    %904 = vrot.lane.b32.xlu0 %v459, 112
    %v905 = vpop.permute.xlu0 %904
    %906 = vrot.lane.b32.xlu0 %v460, 112
    %v907 = vpop.permute.xlu0 %906
    %908 = vrot.lane.b32.xlu0 %v461, 112
    %v909 = vpop.permute.xlu0 %908
    %v926 = vsel %vm274, %v333, %v495
    %v927 = vsel %vm274, %v334, %v497
    %v928 = vsel %vm274, %v335, %v499
    %v929 = vsel %vm274, %v336, %v501
    %v930 = vsel %vm274, %v337, %v503
    %v931 = vsel %vm274, %v338, %v505
    %v932 = vsel %vm274, %v339, %v507
    %v933 = vsel %vm274, %v340, %v509
    %v934 = vsel %vm274, %v341, %v511
    %v935 = vsel %vm274, %v342, %v513
    %v936 = vsel %vm274, %v343, %v515
    %v937 = vsel %vm274, %v344, %v517
    %v938 = vsel %vm274, %v345, %v519
    %v939 = vsel %vm274, %v346, %v521
    %v940 = vsel %vm274, %v347, %v523
    %v941 = vsel %vm274, %v348, %v525
    %vm942 = vcmask 261120
    %v943 = vsel %vm942, %v926, %v559
    %v944 = vsel %vm942, %v927, %v561
    %v945 = vsel %vm942, %v928, %v563
    %v946 = vsel %vm942, %v929, %v565
    %v947 = vsel %vm942, %v930, %v567
    %v948 = vsel %vm942, %v931, %v569
    %v949 = vsel %vm942, %v932, %v571
    %v950 = vsel %vm942, %v933, %v573
    %v951 = vsel %vm942, %v934, %v575
    %v952 = vsel %vm942, %v935, %v577
    %v953 = vsel %vm942, %v936, %v579
    %v954 = vsel %vm942, %v937, %v581
    %v955 = vsel %vm942, %v938, %v583
    %v956 = vsel %vm942, %v939, %v585
    %v957 = vsel %vm942, %v940, %v587
    %v958 = vsel %vm942, %v941, %v589
    %vm959 = vcmask 392192
    %v960 = vsel %vm959, %v943, %v623
    %v961 = vsel %vm959, %v944, %v625
    %v962 = vsel %vm959, %v945, %v627
    %v963 = vsel %vm959, %v946, %v629
    %v964 = vsel %vm959, %v947, %v631
    %v965 = vsel %vm959, %v948, %v633
    %v966 = vsel %vm959, %v949, %v635
    %v967 = vsel %vm959, %v950, %v637
    %v968 = vsel %vm959, %v951, %v639
    %v969 = vsel %vm959, %v952, %v641
    %v970 = vsel %vm959, %v953, %v643
    %v971 = vsel %vm959, %v954, %v645
    %v972 = vsel %vm959, %v955, %v647
    %v973 = vsel %vm959, %v956, %v649
    %v974 = vsel %vm959, %v957, %v651
    %v975 = vsel %vm959, %v958, %v653
    %v976 = vsel %vm64, %v960, %v687
    %v977 = vsel %vm64, %v961, %v689
    %v978 = vsel %vm64, %v962, %v691
    %v979 = vsel %vm64, %v963, %v693
    %v980 = vsel %vm64, %v964, %v695
    %v981 = vsel %vm64, %v965, %v697
    %v982 = vsel %vm64, %v966, %v699
    %v983 = vsel %vm64, %v967, %v701
    %v984 = vsel %vm64, %v968, %v703
    %v985 = vsel %vm64, %v969, %v705
    %v986 = vsel %vm64, %v970, %v707
    %v987 = vsel %vm64, %v971, %v709
    %v988 = vsel %vm64, %v972, %v711
    %v989 = vsel %vm64, %v973, %v713
    %v990 = vsel %vm64, %v974, %v715
    %v991 = vsel %vm64, %v975, %v717
    %vm992 = vcmask 654336
    %v993 = vsel %vm992, %v976, %v751
    %v994 = vsel %vm992, %v977, %v753
    %v995 = vsel %vm992, %v978, %v755
    %v996 = vsel %vm992, %v979, %v757
    %v997 = vsel %vm992, %v980, %v759
    %v998 = vsel %vm992, %v981, %v761
    %v999 = vsel %vm992, %v982, %v763
    %v1000 = vsel %vm992, %v983, %v765
    %v1001 = vsel %vm992, %v984, %v767
    %v1002 = vsel %vm992, %v985, %v769
    %v1003 = vsel %vm992, %v986, %v771
    %v1004 = vsel %vm992, %v987, %v773
    %v1005 = vsel %vm992, %v988, %v775
    %v1006 = vsel %vm992, %v989, %v777
    %v1007 = vsel %vm992, %v990, %v779
    %v1008 = vsel %vm992, %v991, %v781
    %vm1009 = vcmask 785408
    %v1010 = vsel %vm1009, %v993, %v815
    %v1011 = vsel %vm1009, %v994, %v817
    %v1012 = vsel %vm1009, %v995, %v819
    %v1013 = vsel %vm1009, %v996, %v821
    %v1014 = vsel %vm1009, %v997, %v823
    %v1015 = vsel %vm1009, %v998, %v825
    %v1016 = vsel %vm1009, %v999, %v827
    %v1017 = vsel %vm1009, %v1000, %v829
    %v1018 = vsel %vm1009, %v1001, %v831
    %v1019 = vsel %vm1009, %v1002, %v833
    %v1020 = vsel %vm1009, %v1003, %v835
    %v1021 = vsel %vm1009, %v1004, %v837
    %v1022 = vsel %vm1009, %v1005, %v839
    %v1023 = vsel %vm1009, %v1006, %v841
    %v1024 = vsel %vm1009, %v1007, %v843
    %v1025 = vsel %vm1009, %v1008, %v845
    %vm1026 = vcmask 916480
    %v1027 = vsel %vm1026, %v1010, %v879
    %v1028 = vsel %vm1026, %v1011, %v881
    %v1029 = vsel %vm1026, %v1012, %v883
    %v1030 = vsel %vm1026, %v1013, %v885
    %v1031 = vsel %vm1026, %v1014, %v887
    %v1032 = vsel %vm1026, %v1015, %v889
    %v1033 = vsel %vm1026, %v1016, %v891
    %v1034 = vsel %vm1026, %v1017, %v893
    %v1035 = vsel %vm1026, %v1018, %v895
    %v1036 = vsel %vm1026, %v1019, %v897
    %v1037 = vsel %vm1026, %v1020, %v899
    %v1038 = vsel %vm1026, %v1021, %v901
    %v1039 = vsel %vm1026, %v1022, %v903
    %v1040 = vsel %vm1026, %v1023, %v905
    %v1041 = vsel %vm1026, %v1024, %v907
    %v1042 = vsel %vm1026, %v1025, %v909
    %v1043 = vld [vmem:[%s3] sm:$0xff]
    %v1044 = vld [vmem:[%s3 + $0x8] sm:$0xff]
    %v1045 = vld [vmem:[%s3 + $0x10] sm:$0xff]
    %v1046 = vld [vmem:[%s3 + $0x18] sm:$0xff]
    %v1047 = vld [vmem:[%s3 + $0x20] sm:$0xff]
    %v1048 = vld [vmem:[%s3 + $0x28] sm:$0xff]
    %v1049 = vld [vmem:[%s3 + $0x30] sm:$0xff]
    %v1050 = vld [vmem:[%s3 + $0x38] sm:$0xff]
    %v1051 = vld [vmem:[%s3 + $0x40] sm:$0xff]
    %v1052 = vld [vmem:[%s3 + $0x48] sm:$0xff]
    %v1053 = vld [vmem:[%s3 + $0x50] sm:$0xff]
    %v1054 = vld [vmem:[%s3 + $0x58] sm:$0xff]
    %v1055 = vld [vmem:[%s3 + $0x60] sm:$0xff]
    %v1056 = vld [vmem:[%s3 + $0x68] sm:$0xff]
    %v1057 = vld [vmem:[%s3 + $0x70] sm:$0xff]
    %v1058 = vld [vmem:[%s3 + $0x78] sm:$0xff]
    %v1059 = vld [vmem:[%s3 + $0x80] sm:$0xff]
    %v1060 = vld [vmem:[%s3 + $0x88] sm:$0xff]
    %v1061 = vld [vmem:[%s4] sm:$0x1]
    %v1063 = vlaneseq
    %v1064 = vshrl.u32 %v1063, 7
    %v1065 = vsub.s32 0, %v1064
    %v1066 = vrot.slane %v1061, %v1065
    %v1069 = vsel %vm274, %v462, 0
    %v1072 = vsel %vm274, %v463, 0
    %v1075 = vsel %vm274, %v464, 0
    %v1078 = vsel %vm274, %v465, 0
    %v1081 = vsel %vm274, %v466, 0
    %v1084 = vsel %vm274, %v467, 0
    %v1087 = vsel %vm274, %v468, 0
    %v1090 = vsel %vm274, %v469, 0
    %v1093 = vsel %vm274, %v470, 0
    %v1096 = vsel %vm274, %v471, 0
    %v1099 = vsel %vm274, %v472, 0
    %v1102 = vsel %vm274, %v473, 0
    %v1105 = vsel %vm274, %v474, 0
    %v1108 = vsel %vm274, %v475, 0
    %v1111 = vsel %vm274, %v476, 0
    %v1114 = vsel %vm274, %v477, 0
    %1116 = vmatprep.subr.mxu0 0.0
    %1117 = vmatpush1.msra.mxu0 %v1043
    %1118 = vmatprep.subr.mxu0 0.0
    %1119 = vmatpush1.msra.mxu0 %v1044
    %1120 = vmatprep.subr.mxu0 0.0
    %1121 = vmatpush1.msra.mxu0 %v1045
    %1122 = vmatprep.subr.mxu0 0.0
    %1123 = vmatpush1.msra.mxu0 %v1046
    %1124 = vmatprep.subr.mxu0 0.0
    %1125 = vmatpush1.msra.mxu0 %v1047
    %1126 = vmatprep.subr.mxu0 0.0
    %1127 = vmatpush1.msra.mxu0 %v1048
    %1128 = vmatprep.subr.mxu0 0.0
    %1129 = vmatpush1.msra.mxu0 %v1049
    %1130 = vmatprep.subr.mxu0 0.0
    %1131 = vmatpush1.msra.mxu0 %v1050
    %1132 = vmatprep.subr.mxu0 0.0
    %1133 = vmatpush1.msra.mxu0 %v1051
    %1134 = vmatprep.subr.mxu0 0.0
    %1135 = vmatpush1.msra.mxu0 %v1052
    %1136 = vmatprep.subr.mxu0 0.0
    %1137 = vmatpush1.msra.mxu0 %v1053
    %1138 = vmatprep.subr.mxu0 0.0
    %1139 = vmatpush1.msra.mxu0 %v1054
    %1140 = vmatprep.subr.mxu0 0.0
    %1141 = vmatpush1.msra.mxu0 %v1055
    %1142 = vmatprep.subr.mxu0 0.0
    %1143 = vmatpush1.msra.mxu0 %v1056
    %1144 = vmatprep.subr.mxu0 0.0
    %1145 = vmatpush1.msra.mxu0 %v1057
    %1146 = vmatprep.subr.mxu0 0.0
    %1147 = vmatpush1.msra.mxu0 %v1058
    %1148 = vmatprep.subr.mxu0 0.0
    %1149 = vmatpush1.msra.mxu0 %v1059
    %1150 = vmatprep.subr.mxu0 0.0
    %1151 = vmatpush1.msra.mxu0 %v1060
    %1152 = vmatprep.subr.mxu0 0.0
    %1153 = vmatpush1.msra.mxu0 0.0
    %1154 = vmatprep.subr.mxu0 0.0
    %1155 = vmatpush1.msra.mxu0 0.0
    %1156 = vmatprep.subr.mxu0 0.0
    %1157 = vmatpush1.msra.mxu0 0.0
    %1158 = vmatprep.subr.mxu0 0.0
    %1159 = vmatpush1.msra.mxu0 0.0
    %1160 = vmatprep.subr.mxu0 0.0
    %1161 = vmatpush1.msra.mxu0 0.0
    %1162 = vmatprep.subr.mxu0 0.0
    %1163 = vmatpush1.msra.mxu0 0.0
    %1164 = vmatprep.subr.mxu0 0.0
    %1165 = vmatpush1.msra.mxu0 0.0
    %1166 = vmatprep.subr.mxu0 0.0
    %1167 = vmatpush1.msra.mxu0 0.0
    %1168 = vmatprep.subr.mxu0 0.0
    %1169 = vmatpush1.msra.mxu0 0.0
    %1170 = vmatprep.subr.mxu0 0.0
    %1171 = vmatpush1.msra.mxu0 0.0
    %1172 = vmatprep.subr.mxu0 0.0
    %1173 = vmatpush1.msra.mxu0 0.0
    %1174 = vmatprep.subr.mxu0 0.0
    %1175 = vmatpush1.msra.mxu0 0.0
    %1176 = vmatprep.subr.mxu0 0.0
    %1177 = vmatpush1.msra.mxu0 0.0
    %1178 = vmatprep.subr.mxu0 0.0
    %1179 = vmatpush1.msra.mxu0 0.0
    %1180 = vmatprep.mubr.f32.mxu0 %v1069
    %1181 = vmatmul.mubr.f32.gmra.mrb[0].mxu0 %v1027
    %v1182 = vpop.f32.mrb[0].mxu0
    %v1183 = vadd.f32 %v1066, %v1182
    %v1184 = vpop.f32.mrb[0].mxu0
    %1185 = vmatprep.mubr.f32.mxu0 %v1072
    %1186 = vmatmul.mubr.f32.gmra.mrb[0].mxu0 %v1028
    %v1187 = vpop.f32.mrb[0].mxu0
    %v1188 = vadd.f32 %v1066, %v1187
    %v1189 = vpop.f32.mrb[0].mxu0
    %1190 = vmatprep.mubr.f32.mxu0 %v1075
    %1191 = vmatmul.mubr.f32.gmra.mrb[0].mxu0 %v1029
    %v1192 = vpop.f32.mrb[0].mxu0
    %v1193 = vadd.f32 %v1066, %v1192
    %v1194 = vpop.f32.mrb[0].mxu0
    %1195 = vmatprep.mubr.f32.mxu0 %v1078
    %1196 = vmatmul.mubr.f32.gmra.mrb[0].mxu0 %v1030
    %v1197 = vpop.f32.mrb[0].mxu0
    %v1198 = vadd.f32 %v1066, %v1197
    %v1199 = vpop.f32.mrb[0].mxu0
    %1200 = vmatprep.mubr.f32.mxu0 %v1081
    %1201 = vmatmul.mubr.f32.gmra.mrb[0].mxu0 %v1031
    %v1202 = vpop.f32.mrb[0].mxu0
    %v1203 = vadd.f32 %v1066, %v1202
    %v1204 = vpop.f32.mrb[0].mxu0
    %1205 = vmatprep.mubr.f32.mxu0 %v1084
    %1206 = vmatmul.mubr.f32.gmra.mrb[0].mxu0 %v1032
    %v1207 = vpop.f32.mrb[0].mxu0
    %v1208 = vadd.f32 %v1066, %v1207
    %v1209 = vpop.f32.mrb[0].mxu0
    %1210 = vmatprep.mubr.f32.mxu0 %v1087
    %1211 = vmatmul.mubr.f32.gmra.mrb[0].mxu0 %v1033
    %v1212 = vpop.f32.mrb[0].mxu0
    %v1213 = vadd.f32 %v1066, %v1212
    %v1214 = vpop.f32.mrb[0].mxu0
    %1215 = vmatprep.mubr.f32.mxu0 %v1090
    %1216 = vmatmul.mubr.f32.gmra.mrb[0].mxu0 %v1034
    %v1217 = vpop.f32.mrb[0].mxu0
    %v1218 = vadd.f32 %v1066, %v1217
    %v1219 = vpop.f32.mrb[0].mxu0
    %1220 = vmatprep.mubr.f32.mxu0 %v1093
    %1221 = vmatmul.mubr.f32.gmra.mrb[0].mxu0 %v1035
    %v1222 = vpop.f32.mrb[0].mxu0
    %v1223 = vadd.f32 %v1066, %v1222
    %v1224 = vpop.f32.mrb[0].mxu0
    %1225 = vmatprep.mubr.f32.mxu0 %v1096
    %1226 = vmatmul.mubr.f32.gmra.mrb[0].mxu0 %v1036
    %v1227 = vpop.f32.mrb[0].mxu0
    %v1228 = vadd.f32 %v1066, %v1227
    %v1229 = vpop.f32.mrb[0].mxu0
    %1230 = vmatprep.mubr.f32.mxu0 %v1099
    %1231 = vmatmul.mubr.f32.gmra.mrb[0].mxu0 %v1037
    %v1232 = vpop.f32.mrb[0].mxu0
    %v1233 = vadd.f32 %v1066, %v1232
    %v1234 = vpop.f32.mrb[0].mxu0
    %1235 = vmatprep.mubr.f32.mxu0 %v1102
    %1236 = vmatmul.mubr.f32.gmra.mrb[0].mxu0 %v1038
    %v1237 = vpop.f32.mrb[0].mxu0
    %v1238 = vadd.f32 %v1066, %v1237
    %v1239 = vpop.f32.mrb[0].mxu0
    %1240 = vmatprep.mubr.f32.mxu0 %v1105
    %1241 = vmatmul.mubr.f32.gmra.mrb[0].mxu0 %v1039
    %v1242 = vpop.f32.mrb[0].mxu0
    %v1243 = vadd.f32 %v1066, %v1242
    %v1244 = vpop.f32.mrb[0].mxu0
    %1245 = vmatprep.mubr.f32.mxu0 %v1108
    %1246 = vmatmul.mubr.f32.gmra.mrb[0].mxu0 %v1040
    %v1247 = vpop.f32.mrb[0].mxu0
    %v1248 = vadd.f32 %v1066, %v1247
    %v1249 = vpop.f32.mrb[0].mxu0
    %1250 = vmatprep.mubr.f32.mxu0 %v1111
    %1251 = vmatmul.mubr.f32.gmra.mrb[0].mxu0 %v1041
    %v1252 = vpop.f32.mrb[0].mxu0
    %v1253 = vadd.f32 %v1066, %v1252
    %v1254 = vpop.f32.mrb[0].mxu0
    %1255 = vmatprep.mubr.f32.mxu0 %v1114
    %1256 = vmatmul.mubr.f32.gmra.mrb[0].mxu0 %v1042
    %v1257 = vpop.f32.mrb[0].mxu0
    %v1258 = vadd.f32 %v1066, %v1257
    %v1259 = vpop.f32.mrb[0].mxu0
    %1260 = vdwg.mxu0
    %v1261 = vmax.f32 %v1183, 0.0
    %v1262 = vmax.f32 %v1188, 0.0
    %v1263 = vmax.f32 %v1193, 0.0
    %v1264 = vmax.f32 %v1198, 0.0
    %v1265 = vmax.f32 %v1203, 0.0
    %v1266 = vmax.f32 %v1208, 0.0
    %v1267 = vmax.f32 %v1213, 0.0
    %v1268 = vmax.f32 %v1218, 0.0
    %v1269 = vmax.f32 %v1223, 0.0
    %v1270 = vmax.f32 %v1228, 0.0
    %v1271 = vmax.f32 %v1233, 0.0
    %v1272 = vmax.f32 %v1238, 0.0
    %v1273 = vmax.f32 %v1243, 0.0
    %v1274 = vmax.f32 %v1248, 0.0
    %v1275 = vmax.f32 %v1253, 0.0
    %v1276 = vmax.f32 %v1258, 0.0
    %v1277 = vld [vmem:[%s5] sm:$0xff]
    %v1278 = vld [vmem:[%s5 + $0x8] sm:$0xff]
    %v1279 = vld [vmem:[%s6] sm:$0x1]
    %v1281 = vlaneseq
    %v1282 = vshrl.u32 %v1281, 7
    %v1283 = vsub.s32 0, %v1282
    %v1284 = vrot.slane %v1279, %v1283
    %v1287 = vsel %vm274, %v1261, 0
    %v1290 = vsel %vm274, %v1262, 0
    %v1293 = vsel %vm274, %v1263, 0
    %v1296 = vsel %vm274, %v1264, 0
    %v1299 = vsel %vm274, %v1265, 0
    %v1302 = vsel %vm274, %v1266, 0
    %v1305 = vsel %vm274, %v1267, 0
    %v1308 = vsel %vm274, %v1268, 0
    %v1311 = vsel %vm274, %v1269, 0
    %v1314 = vsel %vm274, %v1270, 0
    %v1317 = vsel %vm274, %v1271, 0
    %v1320 = vsel %vm274, %v1272, 0
    %v1323 = vsel %vm274, %v1273, 0
    %v1326 = vsel %vm274, %v1274, 0
    %v1329 = vsel %vm274, %v1275, 0
    %v1332 = vsel %vm274, %v1276, 0
    %1334 = vmatprep.subr.mxu0 0.0
    %1335 = vmatpush1.msra.mxu0 %v1277
    %1336 = vmatprep.subr.mxu0 0.0
    %1337 = vmatpush1.msra.mxu0 %v1278
    %1338 = vmatprep.subr.mxu0 0.0
    %1339 = vmatpush1.msra.mxu0 0.0
    %1340 = vmatprep.subr.mxu0 0.0
    %1341 = vmatpush1.msra.mxu0 0.0
    %1342 = vmatprep.subr.mxu0 0.0
    %1343 = vmatpush1.msra.mxu0 0.0
    %1344 = vmatprep.subr.mxu0 0.0
    %1345 = vmatpush1.msra.mxu0 0.0
    %1346 = vmatprep.subr.mxu0 0.0
    %1347 = vmatpush1.msra.mxu0 0.0
    %1348 = vmatprep.subr.mxu0 0.0
    %1349 = vmatpush1.msra.mxu0 0.0
    %1350 = vmatprep.subr.mxu0 0.0
    %1351 = vmatpush1.msra.mxu0 0.0
    %1352 = vmatprep.subr.mxu0 0.0
    %1353 = vmatpush1.msra.mxu0 0.0
    %1354 = vmatprep.subr.mxu0 0.0
    %1355 = vmatpush1.msra.mxu0 0.0
    %1356 = vmatprep.subr.mxu0 0.0
    %1357 = vmatpush1.msra.mxu0 0.0
    %1358 = vmatprep.subr.mxu0 0.0
    %1359 = vmatpush1.msra.mxu0 0.0
    %1360 = vmatprep.subr.mxu0 0.0
    %1361 = vmatpush1.msra.mxu0 0.0
    %1362 = vmatprep.subr.mxu0 0.0
    %1363 = vmatpush1.msra.mxu0 0.0
    %1364 = vmatprep.subr.mxu0 0.0
    %1365 = vmatpush1.msra.mxu0 0.0
    %1366 = vmatprep.subr.mxu0 0.0
    %1367 = vmatpush1.msra.mxu0 0.0
    %1368 = vmatprep.subr.mxu0 0.0
    %1369 = vmatpush1.msra.mxu0 0.0
    %1370 = vmatprep.subr.mxu0 0.0
    %1371 = vmatpush1.msra.mxu0 0.0
    %1372 = vmatprep.subr.mxu0 0.0
    %1373 = vmatpush1.msra.mxu0 0.0
    %1374 = vmatprep.subr.mxu0 0.0
    %1375 = vmatpush1.msra.mxu0 0.0
    %1376 = vmatprep.subr.mxu0 0.0
    %1377 = vmatpush1.msra.mxu0 0.0
    %1378 = vmatprep.subr.mxu0 0.0
    %1379 = vmatpush1.msra.mxu0 0.0
    %1380 = vmatprep.subr.mxu0 0.0
    %1381 = vmatpush1.msra.mxu0 0.0
    %1382 = vmatprep.subr.mxu0 0.0
    %1383 = vmatpush1.msra.mxu0 0.0
    %1384 = vmatprep.subr.mxu0 0.0
    %1385 = vmatpush1.msra.mxu0 0.0
    %1386 = vmatprep.subr.mxu0 0.0
    %1387 = vmatpush1.msra.mxu0 0.0
    %1388 = vmatprep.subr.mxu0 0.0
    %1389 = vmatpush1.msra.mxu0 0.0
    %1390 = vmatprep.subr.mxu0 0.0
    %1391 = vmatpush1.msra.mxu0 0.0
    %1392 = vmatprep.subr.mxu0 0.0
    %1393 = vmatpush1.msra.mxu0 0.0
    %1394 = vmatprep.subr.mxu0 0.0
    %1395 = vmatpush1.msra.mxu0 0.0
    %1396 = vmatprep.subr.mxu0 0.0
    %1397 = vmatpush1.msra.mxu0 0.0
    %1398 = vmatprep.mubr.f32.mxu0 0.0
    %1399 = vmatmul.mubr.f32.gmra.mrb[0].mxu0 %v1287
    %v1400 = vpop.f32.mrb[0].mxu0
    %v1401 = vadd.f32 %v1284, %v1400
    %v1402 = vpop.f32.mrb[0].mxu0
    %1403 = vmatprep.mubr.f32.mxu0 0.0
    %1404 = vmatmul.mubr.f32.gmra.mrb[0].mxu0 %v1290
    %v1405 = vpop.f32.mrb[0].mxu0
    %v1406 = vadd.f32 %v1284, %v1405
    %v1407 = vpop.f32.mrb[0].mxu0
    %1408 = vmatprep.mubr.f32.mxu0 0.0
    %1409 = vmatmul.mubr.f32.gmra.mrb[0].mxu0 %v1293
    %v1410 = vpop.f32.mrb[0].mxu0
    %v1411 = vadd.f32 %v1284, %v1410
    %v1412 = vpop.f32.mrb[0].mxu0
    %1413 = vmatprep.mubr.f32.mxu0 0.0
    %1414 = vmatmul.mubr.f32.gmra.mrb[0].mxu0 %v1296
    %v1415 = vpop.f32.mrb[0].mxu0
    %v1416 = vadd.f32 %v1284, %v1415
    %v1417 = vpop.f32.mrb[0].mxu0
    %1418 = vmatprep.mubr.f32.mxu0 0.0
    %1419 = vmatmul.mubr.f32.gmra.mrb[0].mxu0 %v1299
    %v1420 = vpop.f32.mrb[0].mxu0
    %v1421 = vadd.f32 %v1284, %v1420
    %v1422 = vpop.f32.mrb[0].mxu0
    %1423 = vmatprep.mubr.f32.mxu0 0.0
    %1424 = vmatmul.mubr.f32.gmra.mrb[0].mxu0 %v1302
    %v1425 = vpop.f32.mrb[0].mxu0
    %v1426 = vadd.f32 %v1284, %v1425
    %v1427 = vpop.f32.mrb[0].mxu0
    %1428 = vmatprep.mubr.f32.mxu0 0.0
    %1429 = vmatmul.mubr.f32.gmra.mrb[0].mxu0 %v1305
    %v1430 = vpop.f32.mrb[0].mxu0
    %v1431 = vadd.f32 %v1284, %v1430
    %v1432 = vpop.f32.mrb[0].mxu0
    %1433 = vmatprep.mubr.f32.mxu0 0.0
    %1434 = vmatmul.mubr.f32.gmra.mrb[0].mxu0 %v1308
    %v1435 = vpop.f32.mrb[0].mxu0
    %v1436 = vadd.f32 %v1284, %v1435
    %v1437 = vpop.f32.mrb[0].mxu0
    %1438 = vmatprep.mubr.f32.mxu0 0.0
    %1439 = vmatmul.mubr.f32.gmra.mrb[0].mxu0 %v1311
    %v1440 = vpop.f32.mrb[0].mxu0
    %v1441 = vadd.f32 %v1284, %v1440
    %v1442 = vpop.f32.mrb[0].mxu0
    %1443 = vmatprep.mubr.f32.mxu0 0.0
    %1444 = vmatmul.mubr.f32.gmra.mrb[0].mxu0 %v1314
    %v1445 = vpop.f32.mrb[0].mxu0
    %v1446 = vadd.f32 %v1284, %v1445
    %v1447 = vpop.f32.mrb[0].mxu0
    %1448 = vmatprep.mubr.f32.mxu0 0.0
    %1449 = vmatmul.mubr.f32.gmra.mrb[0].mxu0 %v1317
    %v1450 = vpop.f32.mrb[0].mxu0
    %v1451 = vadd.f32 %v1284, %v1450
    %v1452 = vpop.f32.mrb[0].mxu0
    %1453 = vmatprep.mubr.f32.mxu0 0.0
    %1454 = vmatmul.mubr.f32.gmra.mrb[0].mxu0 %v1320
    %v1455 = vpop.f32.mrb[0].mxu0
    %v1456 = vadd.f32 %v1284, %v1455
    %v1457 = vpop.f32.mrb[0].mxu0
    %1458 = vmatprep.mubr.f32.mxu0 0.0
    %1459 = vmatmul.mubr.f32.gmra.mrb[0].mxu0 %v1323
    %v1460 = vpop.f32.mrb[0].mxu0
    %v1461 = vadd.f32 %v1284, %v1460
    %v1462 = vpop.f32.mrb[0].mxu0
    %1463 = vmatprep.mubr.f32.mxu0 0.0
    %1464 = vmatmul.mubr.f32.gmra.mrb[0].mxu0 %v1326
    %v1465 = vpop.f32.mrb[0].mxu0
    %v1466 = vadd.f32 %v1284, %v1465
    %v1467 = vpop.f32.mrb[0].mxu0
    %1468 = vmatprep.mubr.f32.mxu0 0.0
    %1469 = vmatmul.mubr.f32.gmra.mrb[0].mxu0 %v1329
    %v1470 = vpop.f32.mrb[0].mxu0
    %v1471 = vadd.f32 %v1284, %v1470
    %v1472 = vpop.f32.mrb[0].mxu0
    %1473 = vmatprep.mubr.f32.mxu0 0.0
    %1474 = vmatmul.mubr.f32.gmra.mrb[0].mxu0 %v1332
    %v1475 = vpop.f32.mrb[0].mxu0
    %v1476 = vadd.f32 %v1284, %v1475
    %v1477 = vpop.f32.mrb[0].mxu0
    %1478 = vdwg.mxu0
    %v1479 = vsel %vm64, %v1401, 0.0
    %v1480 = vsel %vm64, %v1406, 0.0
    %v1481 = vadd.f32 %v1479, %v1480
    %v1482 = vsel %vm64, %v1411, 0.0
    %v1483 = vadd.f32 %v1481, %v1482
    %v1484 = vsel %vm64, %v1416, 0.0
    %v1485 = vadd.f32 %v1483, %v1484
    %v1486 = vsel %vm64, %v1421, 0.0
    %v1487 = vadd.f32 %v1485, %v1486
    %v1488 = vsel %vm64, %v1426, 0.0
    %v1489 = vadd.f32 %v1487, %v1488
    %v1490 = vsel %vm64, %v1431, 0.0
    %v1491 = vadd.f32 %v1489, %v1490
    %v1492 = vsel %vm64, %v1436, 0.0
    %v1493 = vadd.f32 %v1491, %v1492
    %v1494 = vrot.slane %v1493, 4
    %v1495 = vadd.f32 %v1493, %v1494
    %v1496 = vrot.slane %v1495, 2
    %v1497 = vadd.f32 %v1495, %v1496
    %v1498 = vrot.slane %v1497, 1
    %v1499 = vadd.f32 %v1497, %v1498
    %v1500 = vsel %vm64, %v1441, 0.0
    %v1501 = vsel %vm64, %v1446, 0.0
    %v1502 = vadd.f32 %v1500, %v1501
    %v1503 = vsel %vm64, %v1451, 0.0
    %v1504 = vadd.f32 %v1502, %v1503
    %v1505 = vsel %vm64, %v1456, 0.0
    %v1506 = vadd.f32 %v1504, %v1505
    %v1507 = vsel %vm64, %v1461, 0.0
    %v1508 = vadd.f32 %v1506, %v1507
    %v1509 = vsel %vm64, %v1466, 0.0
    %v1510 = vadd.f32 %v1508, %v1509
    %v1511 = vsel %vm64, %v1471, 0.0
    %v1512 = vadd.f32 %v1510, %v1511
    %v1513 = vsel %vm64, %v1476, 0.0
    %v1514 = vadd.f32 %v1512, %v1513
    %v1515 = vrot.slane %v1514, 4
    %v1516 = vadd.f32 %v1514, %v1515
    %v1517 = vrot.slane %v1516, 2
    %v1518 = vadd.f32 %v1516, %v1517
    %v1519 = vrot.slane %v1518, 1
    %v1520 = vadd.f32 %v1518, %v1519
    %v1521 = vrcp.pop 64.0
    %v1522 = vmul.f32 %v1499, %v1521
    %v1523 = vmul.f32 %v1520, %v1521
    %v1524 = vld [vmem:[%s7] sm:$0xff]
    %v1525 = vld [vmem:[%s7 + $0x8] sm:$0xff]
    %v1526 = vld [vmem:[%s7 + $0x10] sm:$0xff]
    %v1527 = vld [vmem:[%s7 + $0x18] sm:$0xff]
    %v1528 = vld [vmem:[%s7 + $0x20] sm:$0xff]
    %v1529 = vld [vmem:[%s7 + $0x28] sm:$0xff]
    %v1530 = vld [vmem:[%s7 + $0x30] sm:$0xff]
    %v1531 = vld [vmem:[%s7 + $0x38] sm:$0xff]
    %vm1534 = vcmask 1041409
    %v1535 = vsel %vm1534, %v1523, %v1522
    %v1536 = vsel %vm64, %v1535, 0
    %1538 = vmatprep.subr.mxu0 0.0
    %1539 = vmatpush1.msra.mxu0 %v1524
    %1540 = vmatprep.subr.mxu0 0.0
    %1541 = vmatpush1.msra.mxu0 %v1525
    %1542 = vmatprep.subr.mxu0 0.0
    %1543 = vmatpush1.msra.mxu0 %v1526
    %1544 = vmatprep.subr.mxu0 0.0
    %1545 = vmatpush1.msra.mxu0 %v1527
    %1546 = vmatprep.subr.mxu0 0.0
    %1547 = vmatpush1.msra.mxu0 %v1528
    %1548 = vmatprep.subr.mxu0 0.0
    %1549 = vmatpush1.msra.mxu0 %v1529
    %1550 = vmatprep.subr.mxu0 0.0
    %1551 = vmatpush1.msra.mxu0 %v1530
    %1552 = vmatprep.subr.mxu0 0.0
    %1553 = vmatpush1.msra.mxu0 %v1531
    %1554 = vmatprep.subr.mxu0 0.0
    %1555 = vmatpush1.msra.mxu0 0.0
    %1556 = vmatprep.subr.mxu0 0.0
    %1557 = vmatpush1.msra.mxu0 0.0
    %1558 = vmatprep.subr.mxu0 0.0
    %1559 = vmatpush1.msra.mxu0 0.0
    %1560 = vmatprep.subr.mxu0 0.0
    %1561 = vmatpush1.msra.mxu0 0.0
    %1562 = vmatprep.subr.mxu0 0.0
    %1563 = vmatpush1.msra.mxu0 0.0
    %1564 = vmatprep.subr.mxu0 0.0
    %1565 = vmatpush1.msra.mxu0 0.0
    %1566 = vmatprep.subr.mxu0 0.0
    %1567 = vmatpush1.msra.mxu0 0.0
    %1568 = vmatprep.subr.mxu0 0.0
    %1569 = vmatpush1.msra.mxu0 0.0
    %1570 = vmatprep.subr.mxu0 0.0
    %1571 = vmatpush1.msra.mxu0 0.0
    %1572 = vmatprep.subr.mxu0 0.0
    %1573 = vmatpush1.msra.mxu0 0.0
    %1574 = vmatprep.subr.mxu0 0.0
    %1575 = vmatpush1.msra.mxu0 0.0
    %1576 = vmatprep.subr.mxu0 0.0
    %1577 = vmatpush1.msra.mxu0 0.0
    %1578 = vmatprep.subr.mxu0 0.0
    %1579 = vmatpush1.msra.mxu0 0.0
    %1580 = vmatprep.subr.mxu0 0.0
    %1581 = vmatpush1.msra.mxu0 0.0
    %1582 = vmatprep.subr.mxu0 0.0
    %1583 = vmatpush1.msra.mxu0 0.0
    %1584 = vmatprep.subr.mxu0 0.0
    %1585 = vmatpush1.msra.mxu0 0.0
    %1586 = vmatprep.subr.mxu0 0.0
    %1587 = vmatpush1.msra.mxu0 0.0
    %1588 = vmatprep.subr.mxu0 0.0
    %1589 = vmatpush1.msra.mxu0 0.0
    %1590 = vmatprep.subr.mxu0 0.0
    %1591 = vmatpush1.msra.mxu0 0.0
    %1592 = vmatprep.subr.mxu0 0.0
    %1593 = vmatpush1.msra.mxu0 0.0
    %1594 = vmatprep.subr.mxu0 0.0
    %1595 = vmatpush1.msra.mxu0 0.0
    %1596 = vmatprep.subr.mxu0 0.0
    %1597 = vmatpush1.msra.mxu0 0.0
    %1598 = vmatprep.subr.mxu0 0.0
    %1599 = vmatpush1.msra.mxu0 0.0
    %1600 = vmatprep.subr.mxu0 0.0
    %1601 = vmatpush1.msra.mxu0 0.0
    %1602 = vmatprep.mubr.f32.mxu0 0.0
    %1603 = vmatmul.mubr.f32.gmra.mrb[0].mxu0 %v1536
    %v1604 = vpop.f32.mrb[0].mxu0
    %v1605 = vadd.f32 0.0, %v1604
    %v1606 = vpop.f32.mrb[0].mxu0
    %1607 = vdwg.mxu0
    %v1608 = vmax.f32 %v1605, 0.0
    %v1609 = vld [vmem:[%s8] sm:$0xf]
    %vm1610 = vcmask 31744
    %v1612 = vsel %vm1610, %v1608, 0
    %vm1614 = vcmask 1043456
    %v1616 = vsel %vm1614, %v1609, 0
    %1618 = vmatprep.subr.mxu0 0.0
    %1619 = vmatpush1.msra.mxu0 %v1616
    %1620 = vmatprep.subr.mxu0 0.0
    %1621 = vmatpush1.msra.mxu0 0.0
    %1622 = vmatprep.subr.mxu0 0.0
    %1623 = vmatpush1.msra.mxu0 0.0
    %1624 = vmatprep.subr.mxu0 0.0
    %1625 = vmatpush1.msra.mxu0 0.0
    %1626 = vmatprep.subr.mxu0 0.0
    %1627 = vmatpush1.msra.mxu0 0.0
    %1628 = vmatprep.subr.mxu0 0.0
    %1629 = vmatpush1.msra.mxu0 0.0
    %1630 = vmatprep.subr.mxu0 0.0
    %1631 = vmatpush1.msra.mxu0 0.0
    %1632 = vmatprep.subr.mxu0 0.0
    %1633 = vmatpush1.msra.mxu0 0.0
    %1634 = vmatprep.subr.mxu0 0.0
    %1635 = vmatpush1.msra.mxu0 0.0
    %1636 = vmatprep.subr.mxu0 0.0
    %1637 = vmatpush1.msra.mxu0 0.0
    %1638 = vmatprep.subr.mxu0 0.0
    %1639 = vmatpush1.msra.mxu0 0.0
    %1640 = vmatprep.subr.mxu0 0.0
    %1641 = vmatpush1.msra.mxu0 0.0
    %1642 = vmatprep.subr.mxu0 0.0
    %1643 = vmatpush1.msra.mxu0 0.0
    %1644 = vmatprep.subr.mxu0 0.0
    %1645 = vmatpush1.msra.mxu0 0.0
    %1646 = vmatprep.subr.mxu0 0.0
    %1647 = vmatpush1.msra.mxu0 0.0
    %1648 = vmatprep.subr.mxu0 0.0
    %1649 = vmatpush1.msra.mxu0 0.0
    %1650 = vmatprep.subr.mxu0 0.0
    %1651 = vmatpush1.msra.mxu0 0.0
    %1652 = vmatprep.subr.mxu0 0.0
    %1653 = vmatpush1.msra.mxu0 0.0
    %1654 = vmatprep.subr.mxu0 0.0
    %1655 = vmatpush1.msra.mxu0 0.0
    %1656 = vmatprep.subr.mxu0 0.0
    %1657 = vmatpush1.msra.mxu0 0.0
    %1658 = vmatprep.subr.mxu0 0.0
    %1659 = vmatpush1.msra.mxu0 0.0
    %1660 = vmatprep.subr.mxu0 0.0
    %1661 = vmatpush1.msra.mxu0 0.0
    %1662 = vmatprep.subr.mxu0 0.0
    %1663 = vmatpush1.msra.mxu0 0.0
    %1664 = vmatprep.subr.mxu0 0.0
    %1665 = vmatpush1.msra.mxu0 0.0
    %1666 = vmatprep.subr.mxu0 0.0
    %1667 = vmatpush1.msra.mxu0 0.0
    %1668 = vmatprep.subr.mxu0 0.0
    %1669 = vmatpush1.msra.mxu0 0.0
    %1670 = vmatprep.subr.mxu0 0.0
    %1671 = vmatpush1.msra.mxu0 0.0
    %1672 = vmatprep.subr.mxu0 0.0
    %1673 = vmatpush1.msra.mxu0 0.0
    %1674 = vmatprep.subr.mxu0 0.0
    %1675 = vmatpush1.msra.mxu0 0.0
    %1676 = vmatprep.subr.mxu0 0.0
    %1677 = vmatpush1.msra.mxu0 0.0
    %1678 = vmatprep.subr.mxu0 0.0
    %1679 = vmatpush1.msra.mxu0 0.0
    %1680 = vmatprep.subr.mxu0 0.0
    %1681 = vmatpush1.msra.mxu0 0.0
    %1682 = vmatprep.mubr.f32.mxu0 0.0
    %1683 = vmatmul.mubr.f32.gmra.mrb[0].mxu0 %v1612
    %v1684 = vpop.f32.mrb[0].mxu0
    %v1685 = vadd.f32 0.0, %v1684
    %v1686 = vpop.f32.mrb[0].mxu0
    %1687 = vdwg.mxu0
    %v1688 = vxor.u32 %v1685, 2147483648
    %v1689 = vmul.f32 %v1688, 1.442695
    %v1690 = vpow.pop %v1689
    %v1691 = vadd.f32 %v1690, 1.0
    %v1692 = vrcp.pop %v1691
    %v1693 = vmul.f32 1.0, %v1692
    %v1696 = vunpack.c.l.s4 1966171168
    %v1697 = vunpack.c.0.s8 %v1696
    %v1698 = vlaneseq
    %v1699 = vshrl.u32 %v1698, 7
    %v1700 = vsub.s32 %v1697, %v1699
    %v1701 = vrot.slane %v1693, %v1700
    %v1702 = vcombine.high %v1701, %v1701
    %v1704 = vunpack.c.l.s4 1966171168
    %v1705 = vunpack.c.0.s8 %v1704
    %v1706 = vlaneseq
    %v1707 = vshrl.u32 %v1706, 7
    %v1708 = vsub.s32 %v1705, %v1707
    %v1709 = vrot.slane %v1701, %v1708
    %v1711 = vunpack.c.l.s4 1966171168
    %v1712 = vunpack.c.0.s8 %v1711
    %v1713 = vlaneseq
    %v1714 = vshrl.u32 %v1713, 7
    %v1715 = vsub.s32 %v1712, %v1714
    %v1716 = vrot.slane %v1702, %v1715
    %v1717 = vlaneseq
    %v1718 = vshrl.u32 %v1717, 7
    %v1719 = vsub.s32 0, %v1718
    %v1720 = vrot.slane %v1709, %v1719
    %v1721 = vlaneseq
    %v1722 = vshrl.u32 %v1721, 7
    %v1723 = vsub.s32 0, %v1722
    %v1724 = vrot.slane %v1716, %v1723
    %v1727 = vmul.f32 %v1401, %v1720
    %v1728 = vmul.f32 %v1406, %v1720
    %v1729 = vmul.f32 %v1411, %v1720
    %v1730 = vmul.f32 %v1416, %v1720
    %v1731 = vmul.f32 %v1421, %v1720
    %v1732 = vmul.f32 %v1426, %v1720
    %v1733 = vmul.f32 %v1431, %v1720
    %v1734 = vmul.f32 %v1436, %v1720
    %v1735 = vmul.f32 %v1441, %v1724
    %v1736 = vmul.f32 %v1446, %v1724
    %v1737 = vmul.f32 %v1451, %v1724
    %v1738 = vmul.f32 %v1456, %v1724
    %v1739 = vmul.f32 %v1461, %v1724
    %v1740 = vmul.f32 %v1466, %v1724
    %v1741 = vmul.f32 %v1471, %v1724
    %v1742 = vmul.f32 %v1476, %v1724
    %v1743 = vadd.f32 %v1727, %v33
    %v1744 = vadd.f32 %v1728, %v34
    %v1745 = vadd.f32 %v1729, %v35
    %v1746 = vadd.f32 %v1730, %v36
    %v1747 = vadd.f32 %v1731, %v37
    %v1748 = vadd.f32 %v1732, %v38
    %v1749 = vadd.f32 %v1733, %v39
    %v1750 = vadd.f32 %v1734, %v40
    %v1751 = vadd.f32 %v1735, %v41
    %v1752 = vadd.f32 %v1736, %v42
    %v1753 = vadd.f32 %v1737, %v43
    %v1754 = vadd.f32 %v1738, %v44
    %v1755 = vadd.f32 %v1739, %v45
    %v1756 = vadd.f32 %v1740, %v46
    %v1757 = vadd.f32 %v1741, %v47
    %v1758 = vadd.f32 %v1742, %v48
    %v1759 = vmax.f32 %v1743, 0.0
    %v1760 = vmax.f32 %v1744, 0.0
    %v1761 = vmax.f32 %v1745, 0.0
    %v1762 = vmax.f32 %v1746, 0.0
    %v1763 = vmax.f32 %v1747, 0.0
    %v1764 = vmax.f32 %v1748, 0.0
    %v1765 = vmax.f32 %v1749, 0.0
    %v1766 = vmax.f32 %v1750, 0.0
    %v1767 = vmax.f32 %v1751, 0.0
    %v1768 = vmax.f32 %v1752, 0.0
    %v1769 = vmax.f32 %v1753, 0.0
    %v1770 = vmax.f32 %v1754, 0.0
    %v1771 = vmax.f32 %v1755, 0.0
    %v1772 = vmax.f32 %v1756, 0.0
    %v1773 = vmax.f32 %v1757, 0.0
    %v1774 = vmax.f32 %v1758, 0.0
    %1775 = vst.msk [vmem:[#allocation3] sm:$0xff] %vm64, %v1759
    %1776 = vst.msk [vmem:[#allocation3 + $0x8] sm:$0xff] %vm64, %v1760
    %1777 = vst.msk [vmem:[#allocation3 + $0x10] sm:$0xff] %vm64, %v1761
    %1778 = vst.msk [vmem:[#allocation3 + $0x18] sm:$0xff] %vm64, %v1762
    %1779 = vst.msk [vmem:[#allocation3 + $0x20] sm:$0xff] %vm64, %v1763
    %1780 = vst.msk [vmem:[#allocation3 + $0x28] sm:$0xff] %vm64, %v1764
    %1781 = vst.msk [vmem:[#allocation3 + $0x30] sm:$0xff] %vm64, %v1765
    %1782 = vst.msk [vmem:[#allocation3 + $0x38] sm:$0xff] %vm64, %v1766
    %1783 = vst.msk [vmem:[#allocation3 + $0x40] sm:$0xff] %vm64, %v1767
    %1784 = vst.msk [vmem:[#allocation3 + $0x48] sm:$0xff] %vm64, %v1768
    %1785 = vst.msk [vmem:[#allocation3 + $0x50] sm:$0xff] %vm64, %v1769
    %1786 = vst.msk [vmem:[#allocation3 + $0x58] sm:$0xff] %vm64, %v1770
    %1787 = vst.msk [vmem:[#allocation3 + $0x60] sm:$0xff] %vm64, %v1771
    %1788 = vst.msk [vmem:[#allocation3 + $0x68] sm:$0xff] %vm64, %v1772
    %1789 = vst.msk [vmem:[#allocation3 + $0x70] sm:$0xff] %vm64, %v1773
    %1790 = vst.msk [vmem:[#allocation3 + $0x78] sm:$0xff] %vm64, %v1774
    // Predicated region
    $region38: #{tpu_custom_call.1} parent=1 // pred_check
      _
    $region39: #{tpu_custom_call.1} parent=1 // pred_check_branch
      %1792 = sbr.rel (0) target = $region41
    $region40: #{tpu_custom_call.1} parent=1 // pred_region
      %s1794 = ssub.s32 2048, 2048
      %1795 = vsyncadd [#allocation4], %s1794
      %s1796 = sshll.u32 [#allocation3], 4
      %s1797 = int_to_ptr.vmem [resolvable:$true] %s1796
      %1802 = dma.vmem_to_hbm [thread:$0]  %s1797, 2048, %s9, [#allocation4], 128, 128, 8
    $region41: #{tpu_custom_call.1} parent=1 // pred_fallthru
      _
    // Predicated region
    $region42: #{tpu_custom_call.1} parent=1 // pred_check
      _
    $region43: #{tpu_custom_call.1} parent=1 // pred_check_branch
      %1804 = sbr.rel (0) target = $region45
    $region44: #{tpu_custom_call.1} parent=1 // pred_region
      %1805 = dma.done [#allocation4], 2048
    $region45: #{tpu_custom_call.1} parent=1 // pred_fallthru
      _
    %1806 = vsyncpa [#allocation4], 1

</llo_original>
